<compile_context>
chip_gen: v6e
topology: v6e:2x2x1
jax: 0.10.0
libtpu: 0.0.40
codegen_flags: <defaults>
</compile_context>

<pallas_src>
import functools
import math

import jax
import jax.numpy as jnp
from jax.experimental import pallas as pl
from jax.experimental.pallas import tpu as pltpu

_HP = 128  # hidden dims (80, 40) zero-padded to a single 128-lane tile


def _device_kind():
    try:
        return jax.devices()[0].device_kind.lower()
    except Exception:
        return ""


def _pick_tb(B, Q, F, two_cores):
    """Batch-tile size: fill MXU rows, bound VMEM, keep megacore busy."""
    pairs = max(1, Q * F)
    tb = max(1, 512 // pairs)                 # target ~512 (q, f) pairs / step
    # VMEM bound (v7x: 64 MiB phys / 32 MiB scoped default): live intermediates
    # cost ~(6*HP + 2*D) bytes per pair -> keep TB*Q*F well under ~40K pairs.
    tb = min(tb, max(1, 40_000 // pairs))
    tb = min(tb, B)
    if two_cores and B >= 2:
        tb = min(tb, (B + 1) // 2)            # keep >= 2 grid steps for megacore
    while B % tb:                             # avoid partial batch blocks
        tb -= 1
    return tb


def din_kernel(q_ref, f_ref, w1_ref, w2_ref, w3t_ref, b12_ref, o_ref, *, bf16_act):
    # q_ref  : (TB, Q, D) f32   queries of this batch tile
    # f_ref  : (TB, F, D) f32   facts of this batch tile
    # w1_ref : (3, D, H)  bf16  combined dense1 weights [q-term, f-term, prod-term]
    # w2_ref : (H, H)     bf16  dense2 weight (zero padded to H=128)
    # w3t_ref: (1, H)     f32   dense3 weight transposed + padded
    # b12_ref: (2, H)     f32   [b1_padded, b2_padded]
    # o_ref  : (TB, Q)    f32
    q = q_ref[...]
    f = f_ref[...]
    TB, Q, D = q.shape
    F = f.shape[1]
    H = w2_ref.shape[1]
    P = TB * Q * F

    qb = q.astype(jnp.bfloat16)
    fb = f.astype(jnp.bfloat16)

    if bf16_act:
        # v6e/v7x: bf16 VPU -> compute the (q, f) outer product directly in bf16.
        prod = (qb[:, :, None, :] * fb[:, None, :, :]).reshape(P, D)
    else:
        # v5e: f32 VPU math, cast only the MXU operand.
        prod = (q[:, :, None, :] * f[:, None, :, :]).reshape(P, D)
        prod = prod.astype(jnp.bfloat16)

    # dense1 with the [q, f, q-f, q*f] concat eliminated (weights combined
    # host-side): three bf16 matmuls, f32 accumulation.
    qp = jnp.dot(qb.reshape(TB * Q, D), w1_ref[0],
                 preferred_element_type=jnp.float32) + b12_ref[0:1, :]   # (TB*Q, H)
    fp = jnp.dot(fb.reshape(TB * F, D), w1_ref[1],
                 preferred_element_type=jnp.float32)                     # (TB*F, H)
    pp = jnp.dot(prod, w1_ref[2], preferred_element_type=jnp.float32)    # (P, H)

    h1_arg = (pp.reshape(TB, Q, F, H)
              + qp.reshape(TB, Q, 1, H)
              + fp.reshape(TB, 1, F, H))
    if bf16_act:
        h1 = jax.nn.sigmoid(h1_arg.astype(jnp.bfloat16))   # bf16 EUP path
    else:
        h1 = jax.nn.sigmoid(h1_arg).astype(jnp.bfloat16)   # f32 EUP (v5e)
    h1 = h1.reshape(P, H)

    # dense2 -> sigmoid (padded lanes carry sigmoid(0)=0.5 but hit zero rows of
    # w2 / zero lanes of w3t, so they never contribute).
    h2 = jax.nn.sigmoid(
        jnp.dot(h1, w2_ref[...], preferred_element_type=jnp.float32)
        + b12_ref[1:2, :])                                                # (P, H) f32

    # dense3 (H -> 1) as a lane reduction; logits laid out (TB, Q, F).
    # dense3 bias omitted: softmax is shift-invariant -> no effect on output.
    logits = jnp.sum(h2.reshape(TB, Q, F, H) * w3t_ref[...], axis=-1)     # (TB, Q, F)

    # softmax over facts, with the divide moved to the EUP approx-recip path.
    m = jnp.max(logits, axis=-1, keepdims=True)
    e = jnp.exp(logits - m)
    probs = e * pl.reciprocal(jnp.sum(e, axis=-1, keepdims=True), approx=True)

    # attention-weighted reduction on the MXU, then sum over the feature dim.
    attended = jnp.einsum('bqf,bfd->bqd', probs, f,
                          preferred_element_type=jnp.float32)             # (TB, Q, D)
    o_ref[...] = jnp.sum(q * attended, axis=-1)                           # (TB, Q)


def pack_din_params(params, D):
    """One-time host-side packing of the DIN MLP weights for the kernel."""
    w1, b1, w2, b2, w3, b3 = params
    H1, H2 = w1.shape[1], w2.shape[1]
    assert H1 <= _HP and H2 <= _HP, "hidden dims are padded to a single 128-lane tile"
    # Split dense1 over the four concatenated input segments and fold the
    # (q - f) segment into the q / f segments:
    #   din_all @ W1 = q @ (W1_q + W1_d) + f @ (W1_f - W1_d) + (q*f) @ W1_p
    w1_q, w1_f, w1_d, w1_p = w1[0:D], w1[D:2 * D], w1[2 * D:3 * D], w1[3 * D:4 * D]
    w1s = jnp.stack([w1_q + w1_d, w1_f - w1_d, w1_p], axis=0)             # (3, D, H1)
    w1s = jnp.pad(w1s, ((0, 0), (0, 0), (0, _HP - H1))).astype(jnp.bfloat16)
    w2p = jnp.pad(w2, ((0, _HP - H1), (0, _HP - H2))).astype(jnp.bfloat16)
    w3t = jnp.pad(w3.T, ((0, 0), (0, _HP - H2))).astype(jnp.float32)      # (1, HP)
    b12 = jnp.stack([jnp.pad(b1, (0, _HP - H1)),
                     jnp.pad(b2, (0, _HP - H2))], axis=0).astype(jnp.float32)
    # b3 intentionally dropped (softmax shift invariance).
    return (w1s, w2p, w3t, b12)


def din_forward(query, facts, packed):
    """Pallas DIN forward: returns [B, Q] (mode='SUM', softmax, mask=None)."""
    w1s, w2p, w3t, b12 = packed
    B, Q, D = query.shape
    F = facts.shape[1]

    kind = _device_kind()
    old_gen = any(v in kind for v in ("v2", "v3", "v4", "v5"))
    bf16_act = not old_gen                                    # bf16 VPU/EUP on v6e/v7x
    two_cores = ("v7" in kind) or ("v4" in kind) or ("v5p" in kind)

    TB = _pick_tb(B, Q, F, two_cores)
    grid = (B // TB,)

    kernel = functools.partial(din_kernel, bf16_act=bf16_act)

    return pl.pallas_call(
        kernel,
        out_shape=jax.ShapeDtypeStruct((B, Q), jnp.float32),
        grid_spec=pltpu.PrefetchScalarGridSpec(
            num_scalar_prefetch=0,
            grid=grid,
            in_specs=[
                pl.BlockSpec((TB, Q, D), lambda b: (b, 0, 0)),   # queries of tile b
                pl.BlockSpec((TB, F, D), lambda b: (b, 0, 0)),   # facts of tile b
                pl.BlockSpec(w1s.shape, lambda b: (0, 0, 0)),
                pl.BlockSpec(w2p.shape, lambda b: (0, 0)),
                pl.BlockSpec(w3t.shape, lambda b: (0, 0)),
                pl.BlockSpec(b12.shape, lambda b: (0, 0)),
            ],
            out_specs=pl.BlockSpec((TB, Q), lambda b: (b, 0)),
        ),
        compiler_params=pltpu.CompilerParams(
            dimension_semantics=("parallel",)),
    )(query, facts, w1s, w2p, w3t, b12)


def din_reference(query, facts, params):
    """Pure-JAX f32 reference mirroring the PyTorch forward (mask=None, SUM)."""
    w1, b1, w2, b2, w3, b3 = params
    B, Q, D = query.shape
    F = facts.shape[1]
    qb = jnp.broadcast_to(query[:, :, None, :], (B, Q, F, D))
    fb = jnp.broadcast_to(facts[:, None, :, :], (B, Q, F, D))
    din_all = jnp.concatenate([qb, fb, qb - fb, qb * fb], axis=-1)
    h1 = jax.nn.sigmoid(din_all @ w1 + b1)
    h2 = jax.nn.sigmoid(h1 @ w2 + b2)
    scores = (h2 @ w3)[..., 0] + b3[0]                             # (B, Q, F)
    scores = jax.nn.softmax(scores, axis=-1)
    out = jnp.einsum('bqf,bfd->bqd', scores, facts)
    return jnp.sum(query * out, axis=-1)


def init_params(key, memory_vector_dim):
    """Deterministic nn.Linear-style init (uniform +/- 1/sqrt(fan_in))."""
    facts_size = memory_vector_dim * 4
    dims = [(facts_size, 80), (80, 40), (40, 1)]
    params = []
    for fan_in, fan_out in dims:
        key, kw, kb = jax.random.split(key, 3)
        bound = 1.0 / math.sqrt(fan_in)
        w = jax.random.uniform(kw, (fan_in, fan_out), jnp.float32, -bound, bound)
        b = jax.random.uniform(kb, (fan_out,), jnp.float32, -bound, bound)
        params.append((w, b))
    (w1, b1), (w2, b2), (w3, b3) = params
    return (w1, b1, w2, b2, w3, b3)


if __name__ == "__main__":
    B, Q, F, D = 2, 8, 8, 32          # memory_vector_dim = 32 -> facts_size = 128

    key = jax.random.PRNGKey(0)
    kq, kf, kp = jax.random.split(key, 3)
    query = jax.random.normal(kq, (B, Q, D), dtype=jnp.float32)
    facts = jax.random.normal(kf, (B, F, D), dtype=jnp.float32)
    params = init_params(kp, memory_vector_dim=D)

    # One-time weight packing (hoisted out of the per-call path), jitted forward.
    packed = jax.tree_util.tree_map(jax.block_until_ready, pack_din_params(params, D))
    fwd = jax.jit(din_forward)

    out = jax.block_until_ready(fwd(query, facts, packed))
    ref = jax.block_until_ready(din_reference(query, facts, params))

    assert out.shape == (B, Q)
    # dense1/dense2 use bf16 MXU operands, (on v6e/v7x) bf16 sigmoid
    # activations, and an approx-reciprocal softmax denominator, so compare
    # against the pure-f32 reference with a correspondingly loose tolerance.
    assert jnp.allclose(out, ref, rtol=2e-2, atol=2e-2), (out, ref)

    print("KERNEL_OK")
</pallas_src>

<mosaic_0001>
module attributes {stable_mosaic.version = 11 : i64} {
  func.func @din_kernel(%arg0: i32, %arg1: memref<2x8x32xf32, #tpu.memory_space<vmem>>, %arg2: memref<2x8x32xf32, #tpu.memory_space<vmem>>, %arg3: memref<3x32x128xbf16, #tpu.memory_space<vmem>>, %arg4: memref<128x128xbf16, #tpu.memory_space<vmem>>, %arg5: memref<1x128xf32, #tpu.memory_space<vmem>>, %arg6: memref<2x128xf32, #tpu.memory_space<vmem>>, %arg7: memref<2x8xf32, #tpu.memory_space<vmem>>) attributes {dimension_semantics = [#tpu.dimension_semantics<parallel>], iteration_bounds = array<i64: 1>, scalar_prefetch = 0 : i64, scratch_operands = 0 : i64, tpu.core_type = #tpu.core_type<tc>, window_params = [{transform_indices = @transform_0, window_bounds = array<i64: 2, 8, 32>}, {transform_indices = @transform_1, window_bounds = array<i64: 2, 8, 32>}, {pipeline_mode = #tpu.pipeline_mode<synchronous>, transform_indices = @transform_2, window_bounds = array<i64: 3, 32, 128>}, {pipeline_mode = #tpu.pipeline_mode<synchronous>, transform_indices = @transform_3, window_bounds = array<i64: 128, 128>}, {pipeline_mode = #tpu.pipeline_mode<synchronous>, transform_indices = @transform_4, window_bounds = array<i64: 1, 128>}, {pipeline_mode = #tpu.pipeline_mode<synchronous>, transform_indices = @transform_5, window_bounds = array<i64: 2, 128>}, {transform_indices = @transform_6, window_bounds = array<i64: 2, 8>}]} {
    %c0 = arith.constant 0 : index
    %c0_0 = arith.constant 0 : index
    %c0_1 = arith.constant 0 : index
    %0 = vector.load %arg1[%c0, %c0_0, %c0_1] : memref<2x8x32xf32, #tpu.memory_space<vmem>>, vector<2x8x32xf32>
    %c0_2 = arith.constant 0 : index
    %c0_3 = arith.constant 0 : index
    %c0_4 = arith.constant 0 : index
    %1 = vector.load %arg2[%c0_2, %c0_3, %c0_4] : memref<2x8x32xf32, #tpu.memory_space<vmem>>, vector<2x8x32xf32>
    %2 = arith.truncf %0 : vector<2x8x32xf32> to vector<2x8x32xbf16>
    %3 = arith.truncf %1 : vector<2x8x32xf32> to vector<2x8x32xbf16>
    %4 = vector.shape_cast %2 : vector<2x8x32xbf16> to vector<2x8x1x32xbf16>
    %5 = vector.shape_cast %3 : vector<2x8x32xbf16> to vector<2x1x8x32xbf16>
    %6 = vector.broadcast %4 : vector<2x8x1x32xbf16> to vector<2x8x8x32xbf16>
    %7 = vector.broadcast %5 : vector<2x1x8x32xbf16> to vector<2x8x8x32xbf16>
    %8 = arith.mulf %6, %7 : vector<2x8x8x32xbf16>
    %9 = vector.shape_cast %8 : vector<2x8x8x32xbf16> to vector<128x32xbf16>
    %10 = vector.shape_cast %2 : vector<2x8x32xbf16> to vector<16x32xbf16>
    %c0_5 = arith.constant 0 : index
    %c0_6 = arith.constant 0 : index
    %c0_7 = arith.constant 0 : index
    %11 = vector.load %arg3[%c0_5, %c0_6, %c0_7] : memref<3x32x128xbf16, #tpu.memory_space<vmem>>, vector<1x32x128xbf16>
    %12 = vector.shape_cast %11 : vector<1x32x128xbf16> to vector<32x128xbf16>
    %cst = arith.constant dense<0.000000e+00> : vector<16x128xf32>
    %13 = tpu.matmul %10, %12, %cst {dimension_numbers = #tpu.dot_dimension_numbers<[1], [0], [0], [1], [0, 0, 1, 1], [], []>} : vector<16x32xbf16>, vector<32x128xbf16>, vector<16x128xf32> -> vector<16x128xf32>
    %c0_8 = arith.constant 0 : index
    %c0_9 = arith.constant 0 : index
    %14 = vector.load %arg6[%c0_8, %c0_9] : memref<2x128xf32, #tpu.memory_space<vmem>>, vector<1x128xf32>
    %15 = vector.broadcast %14 : vector<1x128xf32> to vector<16x128xf32>
    %16 = arith.addf %13, %15 : vector<16x128xf32>
    %17 = vector.shape_cast %3 : vector<2x8x32xbf16> to vector<16x32xbf16>
    %c1 = arith.constant 1 : index
    %c0_10 = arith.constant 0 : index
    %c0_11 = arith.constant 0 : index
    %18 = vector.load %arg3[%c1, %c0_10, %c0_11] : memref<3x32x128xbf16, #tpu.memory_space<vmem>>, vector<1x32x128xbf16>
    %19 = vector.shape_cast %18 : vector<1x32x128xbf16> to vector<32x128xbf16>
    %cst_12 = arith.constant dense<0.000000e+00> : vector<16x128xf32>
    %20 = tpu.matmul %17, %19, %cst_12 {dimension_numbers = #tpu.dot_dimension_numbers<[1], [0], [0], [1], [0, 0, 1, 1], [], []>} : vector<16x32xbf16>, vector<32x128xbf16>, vector<16x128xf32> -> vector<16x128xf32>
    %c2 = arith.constant 2 : index
    %c0_13 = arith.constant 0 : index
    %c0_14 = arith.constant 0 : index
    %21 = vector.load %arg3[%c2, %c0_13, %c0_14] : memref<3x32x128xbf16, #tpu.memory_space<vmem>>, vector<1x32x128xbf16>
    %22 = vector.shape_cast %21 : vector<1x32x128xbf16> to vector<32x128xbf16>
    %cst_15 = arith.constant dense<0.000000e+00> : vector<128x128xf32>
    %23 = tpu.matmul %9, %22, %cst_15 {dimension_numbers = #tpu.dot_dimension_numbers<[1], [0], [0], [1], [0, 0, 1, 1], [], []>} : vector<128x32xbf16>, vector<32x128xbf16>, vector<128x128xf32> -> vector<128x128xf32>
    %24 = vector.shape_cast %23 : vector<128x128xf32> to vector<2x8x8x128xf32>
    %25 = vector.shape_cast %16 : vector<16x128xf32> to vector<2x8x1x128xf32>
    %26 = vector.broadcast %25 : vector<2x8x1x128xf32> to vector<2x8x8x128xf32>
    %27 = arith.addf %24, %26 : vector<2x8x8x128xf32>
    %28 = vector.shape_cast %20 : vector<16x128xf32> to vector<2x1x8x128xf32>
    %29 = vector.broadcast %28 : vector<2x1x8x128xf32> to vector<2x8x8x128xf32>
    %30 = arith.addf %27, %29 : vector<2x8x8x128xf32>
    %31 = arith.truncf %30 : vector<2x8x8x128xf32> to vector<2x8x8x128xbf16>
    %32 = arith.negf %31 : vector<2x8x8x128xbf16>
    %33 = math.exp %32 : vector<2x8x8x128xbf16>
    %cst_16 = arith.constant 1.000000e+00 : bf16
    %34 = vector.broadcast %cst_16 : bf16 to vector<2x8x8x128xbf16>
    %35 = arith.addf %34, %33 : vector<2x8x8x128xbf16>
    %36 = arith.divf %34, %35 : vector<2x8x8x128xbf16>
    %37 = vector.shape_cast %36 : vector<2x8x8x128xbf16> to vector<128x128xbf16>
    %c0_17 = arith.constant 0 : index
    %c0_18 = arith.constant 0 : index
    %38 = vector.load %arg4[%c0_17, %c0_18] : memref<128x128xbf16, #tpu.memory_space<vmem>>, vector<128x128xbf16>
    %cst_19 = arith.constant dense<0.000000e+00> : vector<128x128xf32>
    %39 = tpu.matmul %37, %38, %cst_19 {dimension_numbers = #tpu.dot_dimension_numbers<[1], [0], [0], [1], [0, 0, 1, 1], [], []>} : vector<128x128xbf16>, vector<128x128xbf16>, vector<128x128xf32> -> vector<128x128xf32>
    %c1_20 = arith.constant 1 : index
    %c0_21 = arith.constant 0 : index
    %40 = vector.load %arg6[%c1_20, %c0_21] : memref<2x128xf32, #tpu.memory_space<vmem>>, vector<1x128xf32>
    %41 = vector.broadcast %40 : vector<1x128xf32> to vector<128x128xf32>
    %42 = arith.addf %39, %41 : vector<128x128xf32>
    %43 = arith.negf %42 : vector<128x128xf32>
    %44 = math.exp %43 : vector<128x128xf32>
    %cst_22 = arith.constant 1.000000e+00 : f32
    %45 = vector.broadcast %cst_22 : f32 to vector<128x128xf32>
    %46 = arith.addf %45, %44 : vector<128x128xf32>
    %47 = arith.divf %45, %46 : vector<128x128xf32>
    %48 = vector.shape_cast %47 : vector<128x128xf32> to vector<2x8x8x128xf32>
    %c0_23 = arith.constant 0 : index
    %c0_24 = arith.constant 0 : index
    %49 = vector.load %arg5[%c0_23, %c0_24] : memref<1x128xf32, #tpu.memory_space<vmem>>, vector<1x128xf32>
    %50 = vector.shape_cast %49 : vector<1x128xf32> to vector<1x1x1x128xf32>
    %51 = vector.broadcast %50 : vector<1x1x1x128xf32> to vector<2x8x8x128xf32>
    %52 = arith.mulf %48, %51 : vector<2x8x8x128xf32>
    %cst_25 = arith.constant dense<0.000000e+00> : vector<2x8x8xf32>
    %53 = vector.multi_reduction <add>, %52, %cst_25 [3] : vector<2x8x8x128xf32> to vector<2x8x8xf32>
    %cst_26 = arith.constant dense<0xFF800000> : vector<2x8xf32>
    %54 = vector.multi_reduction <maximumf>, %53, %cst_26 [2] : vector<2x8x8xf32> to vector<2x8xf32>
    %55 = vector.shape_cast %54 : vector<2x8xf32> to vector<2x8x1xf32>
    %56 = vector.broadcast %55 : vector<2x8x1xf32> to vector<2x8x8xf32>
    %57 = arith.subf %53, %56 : vector<2x8x8xf32>
    %58 = math.exp %57 : vector<2x8x8xf32>
    %cst_27 = arith.constant dense<0.000000e+00> : vector<2x8xf32>
    %59 = vector.multi_reduction <add>, %58, %cst_27 [2] : vector<2x8x8xf32> to vector<2x8xf32>
    %60 = vector.shape_cast %59 : vector<2x8xf32> to vector<2x8x1xf32>
    %61 = tpu.reciprocal %60 {approx = true} : vector<2x8x1xf32> -> vector<2x8x1xf32>
    %62 = vector.broadcast %61 : vector<2x8x1xf32> to vector<2x8x8xf32>
    %63 = arith.mulf %58, %62 : vector<2x8x8xf32>
    "tpu.trace_start"() <{level = 10 : i32, message = "bqf,bfd->bqd"}> : () -> ()
    %cst_28 = arith.constant dense<0.000000e+00> : vector<2x8x32xf32>
    %64 = tpu.matmul %63, %1, %cst_28 {dimension_numbers = #tpu.dot_dimension_numbers<[2], [1], [1], [2], [0, 0, 0, 1, 1, 2], [0], [0]>} : vector<2x8x8xf32>, vector<2x8x32xf32>, vector<2x8x32xf32> -> vector<2x8x32xf32>
    "tpu.trace_stop"() : () -> ()
    %65 = arith.mulf %0, %64 : vector<2x8x32xf32>
    %cst_29 = arith.constant dense<0.000000e+00> : vector<2x8xf32>
    %66 = vector.multi_reduction <add>, %65, %cst_29 [2] : vector<2x8x32xf32> to vector<2x8xf32>
    %c0_30 = arith.constant 0 : index
    %c0_31 = arith.constant 0 : index
    %67 = vector.load %arg7[%c0_30, %c0_31] : memref<2x8xf32, #tpu.memory_space<vmem>>, vector<2x8xf32>
    tpu.vector_store %arg7[%c0_30, %c0_31], %66 {strides = array<i32>} : memref<2x8xf32, #tpu.memory_space<vmem>>, vector<2x8xf32>,
    return
  }
  func.func @transform_0(%arg0: i32) -> (i32, i32, i32) {
    %c0_i32 = arith.constant 0 : i32
    %c0_i32_0 = arith.constant 0 : i32
    %c0_i32_1 = arith.constant 0 : i32
    return %arg0, %c0_i32, %c0_i32_0 : i32, i32, i32
  }
  func.func @transform_1(%arg0: i32) -> (i32, i32, i32) {
    %c0_i32 = arith.constant 0 : i32
    %c0_i32_0 = arith.constant 0 : i32
    %c0_i32_1 = arith.constant 0 : i32
    return %arg0, %c0_i32, %c0_i32_0 : i32, i32, i32
  }
  func.func @transform_2(%arg0: i32) -> (i32, i32, i32) {
    %c0_i32 = arith.constant 0 : i32
    %c0_i32_0 = arith.constant 0 : i32
    %c0_i32_1 = arith.constant 0 : i32
    %c0_i32_2 = arith.constant 0 : i32
    return %c0_i32, %c0_i32_0, %c0_i32_1 : i32, i32, i32
  }
  func.func @transform_3(%arg0: i32) -> (i32, i32) {
    %c0_i32 = arith.constant 0 : i32
    %c0_i32_0 = arith.constant 0 : i32
    %c0_i32_1 = arith.constant 0 : i32
    return %c0_i32, %c0_i32_0 : i32, i32
  }
  func.func @transform_4(%arg0: i32) -> (i32, i32) {
    %c0_i32 = arith.constant 0 : i32
    %c0_i32_0 = arith.constant 0 : i32
    %c0_i32_1 = arith.constant 0 : i32
    return %c0_i32, %c0_i32_0 : i32, i32
  }
  func.func @transform_5(%arg0: i32) -> (i32, i32) {
    %c0_i32 = arith.constant 0 : i32
    %c0_i32_0 = arith.constant 0 : i32
    %c0_i32_1 = arith.constant 0 : i32
    return %c0_i32, %c0_i32_0 : i32, i32
  }
  func.func @transform_6(%arg0: i32) -> (i32, i32) {
    %c0_i32 = arith.constant 0 : i32
    %c0_i32_0 = arith.constant 0 : i32
    return %arg0, %c0_i32 : i32, i32
  }
}

</mosaic_0001>

<llo_original>
// kernel: din_forward.1
$region0: #{din_forward.1}
  #allocation0 [shape = 'u32[]', space=smem, size = 0x4, offset = 0x4, fixed_abs, tag = 'smem constant byte address 0x4 - core index']
  #allocation1 [shape = 'u32[144,128]{1,0:T(1,128)}', space=vmem, size = 0x12000, scoped, tag = 'internal scratch']
  %s0 = inlined_call_operand.hbm [shape: f32[2,8,32], index: 0, kind: input, shape index: {}]
  %s1 = inlined_call_operand.hbm [shape: f32[2,8,32], index: 1, kind: input, shape index: {}]
  %s2 = inlined_call_operand.hbm [shape: bf16[3,32,128], index: 2, kind: input, shape index: {}]
  %s3 = inlined_call_operand.hbm [shape: bf16[128,128], index: 3, kind: input, shape index: {}]
  %s4 = inlined_call_operand.vmem [shape: f32[1,128], index: 4, kind: input, shape index: {}]
  %s5 = inlined_call_operand.vmem [shape: f32[2,128], index: 5, kind: input, shape index: {}]
  %s6 = inlined_call_operand.hbm [shape: f32[2,8], index: 6, kind: output, shape index: {}]
  %s7 = sld [smem:[#allocation0]]
  $region50: #{din_forward.1} parent=0
    _
  %s9 = ssub.s32 1, %s7
  %s10 = scalar_select 0, %s9, %s7
  $region1: #{din_forward.1} parent=0
    #allocation2 [shape = 'u8[8192]{0}', space=vmem, size = 0x2000, scoped, tag = 'input window, operand 0, single buffered']
    #allocation3 [shape = 's32[1]{0}', space=sflag, size = 0x4, scoped, tag = 'scoped memory for din_forward.1']
    #allocation4 [shape = 's32[1]{0}', space=sflag, size = 0x4, scoped, tag = 'scoped memory for din_forward.1']
    #allocation5 [shape = 'u8[8192]{0}', space=vmem, size = 0x2000, scoped, tag = 'input window, operand 1, single buffered']
    #allocation6 [shape = 's32[1]{0}', space=sflag, size = 0x4, scoped, tag = 'scoped memory for din_forward.1']
    #allocation7 [shape = 'u8[24576]{0}', space=vmem, size = 0x6000, scoped, tag = 'input window, operand 2, single buffered']
    #allocation8 [shape = 'u8[32768]{0}', space=vmem, size = 0x8000, scoped, tag = 'input window, operand 3, single buffered']
    #allocation9 [shape = 's32[1]{0}', space=sflag, size = 0x4, scoped, tag = 'scoped memory for din_forward.1']
    #allocation10 [shape = 'u8[1024]{0}', space=vmem, size = 0x400, scoped, tag = 'output window, operand 0, single buffered']
    %11 = vsyncpa [#allocation3], 0
    %12 = vsyncpa [#allocation6], 0
    %13 = vsyncpa [#allocation9], 0
    %14 = vsyncpa [#allocation4], 0
    // Predicated region
    $region2: #{din_forward.1} parent=1 // pred_check
      _
    $region3: #{din_forward.1} parent=1 // pred_check_branch
      %16 = sbr.rel (0) target = $region5
    $region4: #{din_forward.1} parent=1 // pred_region
      %s18 = ssub.s32 256, 256
      %19 = vsyncadd [#allocation3], %s18
      %s20 = sshll.u32 [#allocation2], 4
      %s21 = int_to_ptr.vmem [resolvable:$true] %s20
      %26 = dma.hbm_to_vmem [thread:$0]  %s0, 256, %s21, [#allocation3], 128, 128, 8
    $region5: #{din_forward.1} parent=1 // pred_fallthru
      _
    // Predicated region
    $region6: #{din_forward.1} parent=1 // pred_check
      _
    $region7: #{din_forward.1} parent=1 // pred_check_branch
      %28 = sbr.rel (0) target = $region9
    $region8: #{din_forward.1} parent=1 // pred_region
      %s30 = ssub.s32 256, 256
      %31 = vsyncadd [#allocation6], %s30
      %s32 = sshll.u32 [#allocation5], 4
      %s33 = int_to_ptr.vmem [resolvable:$true] %s32
      %38 = dma.hbm_to_vmem [thread:$0]  %s1, 256, %s33, [#allocation6], 128, 128, 8
    $region9: #{din_forward.1} parent=1 // pred_fallthru
      _
    // Predicated region
    $region10: #{din_forward.1} parent=1 // pred_check
      _
    $region11: #{din_forward.1} parent=1 // pred_check_branch
      %40 = sbr.rel (0) target = $region13
    $region12: #{din_forward.1} parent=1 // pred_region
      %s42 = ssub.s32 768, 768
      %43 = vsyncadd [#allocation6], %s42
      %s44 = sshll.u32 [#allocation7], 4
      %s45 = int_to_ptr.vmem [resolvable:$true] %s44
      %50 = dma.hbm_to_vmem [thread:$0]  %s2, 768, %s45, [#allocation6], 64, 64, 4
    $region13: #{din_forward.1} parent=1 // pred_fallthru
      _
    // Predicated region
    $region14: #{din_forward.1} parent=1 // pred_check
      _
    $region15: #{din_forward.1} parent=1 // pred_check_branch
      %52 = sbr.rel (0) target = $region17
    $region16: #{din_forward.1} parent=1 // pred_region
      %s54 = ssub.s32 1024, 1024
      %55 = vsyncadd [#allocation9], %s54
      %s56 = sshll.u32 [#allocation8], 4
      %s57 = int_to_ptr.vmem [resolvable:$true] %s56
      %62 = dma.hbm_to_vmem [thread:$0]  %s3, 1024, %s57, [#allocation9], 64, 64, 4
    $region17: #{din_forward.1} parent=1 // pred_fallthru
      _
    // Predicated region
    $region18: #{din_forward.1} parent=1 // pred_check
      _
    $region19: #{din_forward.1} parent=1 // pred_check_branch
      %64 = sbr.rel (0) target = $region21
    $region20: #{din_forward.1} parent=1 // pred_region
      _
    $region21: #{din_forward.1} parent=1 // pred_fallthru
      _
    // Predicated region
    $region22: #{din_forward.1} parent=1 // pred_check
      _
    $region23: #{din_forward.1} parent=1 // pred_check_branch
      %66 = sbr.rel (0) target = $region25
    $region24: #{din_forward.1} parent=1 // pred_region
      _
    $region25: #{din_forward.1} parent=1 // pred_fallthru
      _
    // Predicated region
    $region26: #{din_forward.1} parent=1 // pred_check
      _
    $region27: #{din_forward.1} parent=1 // pred_check_branch
      %68 = sbr.rel (0) target = $region29
    $region28: #{din_forward.1} parent=1 // pred_region
      %69 = dma.done [#allocation3], 256
    $region29: #{din_forward.1} parent=1 // pred_fallthru
      _
    // Predicated region
    $region30: #{din_forward.1} parent=1 // pred_check
      _
    $region31: #{din_forward.1} parent=1 // pred_check_branch
      %71 = sbr.rel (0) target = $region33
    $region32: #{din_forward.1} parent=1 // pred_region
      %72 = dma.done [#allocation6], 256
    $region33: #{din_forward.1} parent=1 // pred_fallthru
      _
    // Predicated region
    $region34: #{din_forward.1} parent=1 // pred_check
      _
    $region35: #{din_forward.1} parent=1 // pred_check_branch
      %74 = sbr.rel (0) target = $region37
    $region36: #{din_forward.1} parent=1 // pred_region
      %75 = dma.done [#allocation6], 768
    $region37: #{din_forward.1} parent=1 // pred_fallthru
      _
    // Predicated region
    $region38: #{din_forward.1} parent=1 // pred_check
      _
    $region39: #{din_forward.1} parent=1 // pred_check_branch
      %77 = sbr.rel (0) target = $region41
    $region40: #{din_forward.1} parent=1 // pred_region
      %78 = dma.done [#allocation9], 1024
    $region41: #{din_forward.1} parent=1 // pred_fallthru
      _
    %v81 = vld [vmem:[#allocation2] sm:$0xff]
    %v82 = vld [vmem:[#allocation2 + $0x8] sm:$0xff]
    %v83 = vld [vmem:[#allocation5] sm:$0xff]
    %v84 = vld [vmem:[#allocation5 + $0x8] sm:$0xff]
    %v85 = vpack.c.bf16 %v81, %v81
    %v86 = vpack.c.bf16 %v82, %v82
    %v87 = vpack.c.bf16 %v83, %v83
    %v88 = vpack.c.bf16 %v84, %v84
    %v92 = vunpack.c.l.s4 1966171168
    %v93 = vunpack.c.0.s8 %v92
    %v94 = vlaneseq
    %v95 = vshrl.u32 %v94, 7
    %v96 = vsub.s32 %v93, %v95
    %v97 = vrot.slane %v85, %v96
    %v98 = vcombine.high %v97, %v97
    %v100 = vunpack.c.l.s4 1966171168
    %v101 = vunpack.c.0.s8 %v100
    %v102 = vlaneseq
    %v103 = vshrl.u32 %v102, 7
    %v104 = vsub.s32 %v101, %v103
    %v105 = vrot.slane %v97, %v104
    %v107 = vunpack.c.l.s4 1966171168
    %v108 = vunpack.c.0.s8 %v107
    %v109 = vlaneseq
    %v110 = vshrl.u32 %v109, 7
    %v111 = vsub.s32 %v108, %v110
    %v112 = vrot.slane %v98, %v111
    %v113 = vcombine.high %v105, %v105
    %v114 = vcombine.high %v112, %v112
    %v116 = vunpack.c.l.s4 1966171168
    %v117 = vunpack.c.0.s8 %v116
    %v118 = vlaneseq
    %v119 = vshrl.u32 %v118, 7
    %v120 = vsub.s32 %v117, %v119
    %v121 = vrot.slane %v86, %v120
    %v122 = vcombine.high %v121, %v121
    %v124 = vunpack.c.l.s4 1966171168
    %v125 = vunpack.c.0.s8 %v124
    %v126 = vlaneseq
    %v127 = vshrl.u32 %v126, 7
    %v128 = vsub.s32 %v125, %v127
    %v129 = vrot.slane %v121, %v128
    %v131 = vunpack.c.l.s4 1966171168
    %v132 = vunpack.c.0.s8 %v131
    %v133 = vlaneseq
    %v134 = vshrl.u32 %v133, 7
    %v135 = vsub.s32 %v132, %v134
    %v136 = vrot.slane %v122, %v135
    %v137 = vcombine.high %v129, %v129
    %v138 = vcombine.high %v136, %v136
    %v139 = vunpack.i.l.s16 %v105
    %v140 = vunpack.i.h.s16 %v105
    %v141 = vunpack.i.l.s16 %v112
    %v142 = vunpack.i.h.s16 %v112
    %v143 = vunpack.i.l.s16 %v113
    %v144 = vunpack.i.h.s16 %v113
    %v145 = vunpack.i.l.s16 %v114
    %v146 = vunpack.i.h.s16 %v114
    %v147 = vunpack.i.l.s16 %v129
    %v148 = vunpack.i.h.s16 %v129
    %v149 = vunpack.i.l.s16 %v136
    %v150 = vunpack.i.h.s16 %v136
    %v151 = vunpack.i.l.s16 %v137
    %v152 = vunpack.i.h.s16 %v137
    %v153 = vunpack.i.l.s16 %v138
    %v154 = vunpack.i.h.s16 %v138
    %v155 = vpack.i.b16 %v139, %v139
    %v156 = vpack.i.b16 %v140, %v140
    %v157 = vpack.i.b16 %v141, %v141
    %v158 = vpack.i.b16 %v142, %v142
    %v159 = vpack.i.b16 %v143, %v143
    %v160 = vpack.i.b16 %v144, %v144
    %v161 = vpack.i.b16 %v145, %v145
    %v162 = vpack.i.b16 %v146, %v146
    %v163 = vpack.i.b16 %v147, %v147
    %v164 = vpack.i.b16 %v148, %v148
    %v165 = vpack.i.b16 %v149, %v149
    %v166 = vpack.i.b16 %v150, %v150
    %v167 = vpack.i.b16 %v151, %v151
    %v168 = vpack.i.b16 %v152, %v152
    %v169 = vpack.i.b16 %v153, %v153
    %v170 = vpack.i.b16 %v154, %v154
    %v171 = vlaneseq
    %v172 = vshrl.u32 %v171, 7
    %v173 = vsub.s32 0, %v172
    %v174 = vrot.slane %v155, %v173
    %v175 = vlaneseq
    %v176 = vshrl.u32 %v175, 7
    %v177 = vsub.s32 0, %v176
    %v178 = vrot.slane %v156, %v177
    %v179 = vlaneseq
    %v180 = vshrl.u32 %v179, 7
    %v181 = vsub.s32 0, %v180
    %v182 = vrot.slane %v157, %v181
    %v183 = vlaneseq
    %v184 = vshrl.u32 %v183, 7
    %v185 = vsub.s32 0, %v184
    %v186 = vrot.slane %v158, %v185
    %v187 = vlaneseq
    %v188 = vshrl.u32 %v187, 7
    %v189 = vsub.s32 0, %v188
    %v190 = vrot.slane %v159, %v189
    %v191 = vlaneseq
    %v192 = vshrl.u32 %v191, 7
    %v193 = vsub.s32 0, %v192
    %v194 = vrot.slane %v160, %v193
    %v195 = vlaneseq
    %v196 = vshrl.u32 %v195, 7
    %v197 = vsub.s32 0, %v196
    %v198 = vrot.slane %v161, %v197
    %v199 = vlaneseq
    %v200 = vshrl.u32 %v199, 7
    %v201 = vsub.s32 0, %v200
    %v202 = vrot.slane %v162, %v201
    %v203 = vlaneseq
    %v204 = vshrl.u32 %v203, 7
    %v205 = vsub.s32 0, %v204
    %v206 = vrot.slane %v163, %v205
    %v207 = vlaneseq
    %v208 = vshrl.u32 %v207, 7
    %v209 = vsub.s32 0, %v208
    %v210 = vrot.slane %v164, %v209
    %v211 = vlaneseq
    %v212 = vshrl.u32 %v211, 7
    %v213 = vsub.s32 0, %v212
    %v214 = vrot.slane %v165, %v213
    %v215 = vlaneseq
    %v216 = vshrl.u32 %v215, 7
    %v217 = vsub.s32 0, %v216
    %v218 = vrot.slane %v166, %v217
    %v219 = vlaneseq
    %v220 = vshrl.u32 %v219, 7
    %v221 = vsub.s32 0, %v220
    %v222 = vrot.slane %v167, %v221
    %v223 = vlaneseq
    %v224 = vshrl.u32 %v223, 7
    %v225 = vsub.s32 0, %v224
    %v226 = vrot.slane %v168, %v225
    %v227 = vlaneseq
    %v228 = vshrl.u32 %v227, 7
    %v229 = vsub.s32 0, %v228
    %v230 = vrot.slane %v169, %v229
    %v231 = vlaneseq
    %v232 = vshrl.u32 %v231, 7
    %v233 = vsub.s32 0, %v232
    %v234 = vrot.slane %v170, %v233
    %v236 = vpack.i.b16 %v174, %v174
    %v238 = vlaneseq
    %v239 = vshrl.u32 %v238, 7
    %v240 = vsub.s32 0, %v239
    %v241 = vrot.slane %v236, %v240
    %v243 = vpack.i.b16 %v178, %v178
    %v245 = vlaneseq
    %v246 = vshrl.u32 %v245, 7
    %v247 = vsub.s32 0, %v246
    %v248 = vrot.slane %v243, %v247
    %v250 = vpack.i.b16 %v182, %v182
    %v252 = vlaneseq
    %v253 = vshrl.u32 %v252, 7
    %v254 = vsub.s32 0, %v253
    %v255 = vrot.slane %v250, %v254
    %v257 = vpack.i.b16 %v186, %v186
    %v259 = vlaneseq
    %v260 = vshrl.u32 %v259, 7
    %v261 = vsub.s32 0, %v260
    %v262 = vrot.slane %v257, %v261
    %v264 = vpack.i.b16 %v190, %v190
    %v266 = vlaneseq
    %v267 = vshrl.u32 %v266, 7
    %v268 = vsub.s32 0, %v267
    %v269 = vrot.slane %v264, %v268
    %v271 = vpack.i.b16 %v194, %v194
    %v273 = vlaneseq
    %v274 = vshrl.u32 %v273, 7
    %v275 = vsub.s32 0, %v274
    %v276 = vrot.slane %v271, %v275
    %v278 = vpack.i.b16 %v198, %v198
    %v280 = vlaneseq
    %v281 = vshrl.u32 %v280, 7
    %v282 = vsub.s32 0, %v281
    %v283 = vrot.slane %v278, %v282
    %v285 = vpack.i.b16 %v202, %v202
    %v287 = vlaneseq
    %v288 = vshrl.u32 %v287, 7
    %v289 = vsub.s32 0, %v288
    %v290 = vrot.slane %v285, %v289
    %v292 = vpack.i.b16 %v206, %v206
    %v294 = vlaneseq
    %v295 = vshrl.u32 %v294, 7
    %v296 = vsub.s32 0, %v295
    %v297 = vrot.slane %v292, %v296
    %v299 = vpack.i.b16 %v210, %v210
    %v301 = vlaneseq
    %v302 = vshrl.u32 %v301, 7
    %v303 = vsub.s32 0, %v302
    %v304 = vrot.slane %v299, %v303
    %v306 = vpack.i.b16 %v214, %v214
    %v308 = vlaneseq
    %v309 = vshrl.u32 %v308, 7
    %v310 = vsub.s32 0, %v309
    %v311 = vrot.slane %v306, %v310
    %v313 = vpack.i.b16 %v218, %v218
    %v315 = vlaneseq
    %v316 = vshrl.u32 %v315, 7
    %v317 = vsub.s32 0, %v316
    %v318 = vrot.slane %v313, %v317
    %v320 = vpack.i.b16 %v222, %v222
    %v322 = vlaneseq
    %v323 = vshrl.u32 %v322, 7
    %v324 = vsub.s32 0, %v323
    %v325 = vrot.slane %v320, %v324
    %v327 = vpack.i.b16 %v226, %v226
    %v329 = vlaneseq
    %v330 = vshrl.u32 %v329, 7
    %v331 = vsub.s32 0, %v330
    %v332 = vrot.slane %v327, %v331
    %v334 = vpack.i.b16 %v230, %v230
    %v336 = vlaneseq
    %v337 = vshrl.u32 %v336, 7
    %v338 = vsub.s32 0, %v337
    %v339 = vrot.slane %v334, %v338
    %v341 = vpack.i.b16 %v234, %v234
    %v343 = vlaneseq
    %v344 = vshrl.u32 %v343, 7
    %v345 = vsub.s32 0, %v344
    %v346 = vrot.slane %v341, %v345
    %v347 = vmul.bf16 %v241, %v87
    %v348 = vmul.bf16 %v248, %v87
    %v349 = vmul.bf16 %v255, %v87
    %v350 = vmul.bf16 %v262, %v87
    %v351 = vmul.bf16 %v269, %v87
    %v352 = vmul.bf16 %v276, %v87
    %v353 = vmul.bf16 %v283, %v87
    %v354 = vmul.bf16 %v290, %v87
    %v355 = vmul.bf16 %v297, %v88
    %v356 = vmul.bf16 %v304, %v88
    %v357 = vmul.bf16 %v311, %v88
    %v358 = vmul.bf16 %v318, %v88
    %v359 = vmul.bf16 %v325, %v88
    %v360 = vmul.bf16 %v332, %v88
    %v361 = vmul.bf16 %v339, %v88
    %v362 = vmul.bf16 %v346, %v88
    %v363 = vld [vmem:[#allocation7] sm:$0xf]
    %v364 = vld [vmem:[#allocation7 + $0x4] sm:$0xf]
    %v365 = vld [vmem:[#allocation7 + $0x8] sm:$0xf]
    %v366 = vld [vmem:[#allocation7 + $0xc] sm:$0xf]
    %v367 = vld [vmem:[%s5] sm:$0x1]
    %v368 = vlaneseq
    %v369 = vshrl.u32 %v368, 7
    %v370 = vsub.s32 0, %v369
    %v371 = vrot.slane %v367, %v370
    %v372 = vunpack.c.l.b16 %v85
    %v373 = vunpack.c.l.b16 %v86
    %v374 = vpack.c.b16 %v373, %v372
    %v379 = vunpack.c.l.b16 %v363
    %v380 = vunpack.c.l.b16 %v364
    %v381 = vunpack.c.l.b16 %v365
    %v382 = vunpack.c.l.b16 %v366
    %v383 = vpack.c.b16 %v380, %v379
    %v384 = vpack.c.b16 %v382, %v381
    %vm387 = vcmask 261120
    %v389 = vsel %vm387, %v374, 0
    %391 = vmatprep.subr.bf16.mxu0 0
    %392 = vmatpush1.bf16.msra.mxu0 0
    %393 = vmatprep.subr.bf16.mxu0 0
    %394 = vmatpush1.bf16.msra.mxu0 0
    %395 = vmatprep.subr.bf16.mxu0 0
    %396 = vmatpush1.bf16.msra.mxu0 0
    %397 = vmatprep.subr.bf16.mxu0 0
    %398 = vmatpush1.bf16.msra.mxu0 0
    %399 = vmatprep.subr.bf16.mxu0 0
    %400 = vmatpush1.bf16.msra.mxu0 0
    %401 = vmatprep.subr.bf16.mxu0 0
    %402 = vmatpush1.bf16.msra.mxu0 0
    %403 = vmatprep.subr.bf16.mxu0 0
    %404 = vmatpush1.bf16.msra.mxu0 %v384
    %405 = vmatprep.subr.bf16.mxu0 0
    %406 = vmatpush1.bf16.msra.mxu0 %v383
    %407 = vmatprep.subr.bf16.mxu0 0
    %408 = vmatpush2.bf16.msra.mxu0 0
    %409 = vmatprep.subr.bf16.mxu0 0
    %410 = vmatpush2.bf16.msra.mxu0 0
    %411 = vmatprep.subr.bf16.mxu0 0
    %412 = vmatpush2.bf16.msra.mxu0 0
    %413 = vmatprep.subr.bf16.mxu0 0
    %414 = vmatpush2.bf16.msra.mxu0 0
    %415 = vmatprep.subr.bf16.mxu0 0
    %416 = vmatpush2.bf16.msra.mxu0 0
    %417 = vmatprep.subr.bf16.mxu0 0
    %418 = vmatpush2.bf16.msra.mxu0 0
    %419 = vmatprep.subr.bf16.mxu0 0
    %420 = vmatpush2.bf16.msra.mxu0 0
    %421 = vmatprep.subr.bf16.mxu0 0
    %422 = vmatpush2.bf16.msra.mxu0 0
    %423 = vmatprep.mubr.bf16.mxu0 0
    %424 = vmatmul.mubr.bf16.gmra.mxu0 %v389
    %v425 = vpop.f32.mrf.mxu0
    %v426 = vadd.f32 %v371, %v425
    %v427 = vpop.f32.mrf.mxu0
    %v428 = vpop.f32.mrf.mxu0
    %v429 = vadd.f32 %v371, %v428
    %v430 = vpop.f32.mrf.mxu0
    %431 = vdwg.mxu0
    %s432 = scalar_lea.vmem [#allocation7], 16
    %v433 = vld [vmem:[%s432] sm:$0xf]
    %v434 = vld [vmem:[%s432 + $0x4] sm:$0xf]
    %v435 = vld [vmem:[%s432 + $0x8] sm:$0xf]
    %v436 = vld [vmem:[%s432 + $0xc] sm:$0xf]
    %v439 = vunpack.c.l.b16 %v87
    %v440 = vunpack.c.l.b16 %v88
    %v441 = vpack.c.b16 %v440, %v439
    %v446 = vunpack.c.l.b16 %v433
    %v447 = vunpack.c.l.b16 %v434
    %v448 = vunpack.c.l.b16 %v435
    %v449 = vunpack.c.l.b16 %v436
    %v450 = vpack.c.b16 %v447, %v446
    %v451 = vpack.c.b16 %v449, %v448
    %v455 = vsel %vm387, %v441, 0
    %457 = vmatprep.subr.bf16.mxu0 0
    %458 = vmatpush1.bf16.msra.mxu0 0
    %459 = vmatprep.subr.bf16.mxu0 0
    %460 = vmatpush1.bf16.msra.mxu0 0
    %461 = vmatprep.subr.bf16.mxu0 0
    %462 = vmatpush1.bf16.msra.mxu0 0
    %463 = vmatprep.subr.bf16.mxu0 0
    %464 = vmatpush1.bf16.msra.mxu0 0
    %465 = vmatprep.subr.bf16.mxu0 0
    %466 = vmatpush1.bf16.msra.mxu0 0
    %467 = vmatprep.subr.bf16.mxu0 0
    %468 = vmatpush1.bf16.msra.mxu0 0
    %469 = vmatprep.subr.bf16.mxu0 0
    %470 = vmatpush1.bf16.msra.mxu0 %v451
    %471 = vmatprep.subr.bf16.mxu0 0
    %472 = vmatpush1.bf16.msra.mxu0 %v450
    %473 = vmatprep.subr.bf16.mxu0 0
    %474 = vmatpush2.bf16.msra.mxu0 0
    %475 = vmatprep.subr.bf16.mxu0 0
    %476 = vmatpush2.bf16.msra.mxu0 0
    %477 = vmatprep.subr.bf16.mxu0 0
    %478 = vmatpush2.bf16.msra.mxu0 0
    %479 = vmatprep.subr.bf16.mxu0 0
    %480 = vmatpush2.bf16.msra.mxu0 0
    %481 = vmatprep.subr.bf16.mxu0 0
    %482 = vmatpush2.bf16.msra.mxu0 0
    %483 = vmatprep.subr.bf16.mxu0 0
    %484 = vmatpush2.bf16.msra.mxu0 0
    %485 = vmatprep.subr.bf16.mxu0 0
    %486 = vmatpush2.bf16.msra.mxu0 0
    %487 = vmatprep.subr.bf16.mxu0 0
    %488 = vmatpush2.bf16.msra.mxu0 0
    %489 = vmatprep.mubr.bf16.mxu0 0
    %490 = vmatmul.mubr.bf16.gmra.mxu0 %v455
    %v491 = vpop.f32.mrf.mxu0
    %v492 = vadd.f32 0.0, %v491
    %v493 = vpop.f32.mrf.mxu0
    %v494 = vpop.f32.mrf.mxu0
    %v495 = vadd.f32 0.0, %v494
    %v496 = vpop.f32.mrf.mxu0
    %497 = vdwg.mxu0
    %s498 = scalar_lea.vmem [#allocation7], 32
    %v499 = vld [vmem:[%s498] sm:$0xf]
    %v500 = vld [vmem:[%s498 + $0x4] sm:$0xf]
    %v501 = vld [vmem:[%s498 + $0x8] sm:$0xf]
    %v502 = vld [vmem:[%s498 + $0xc] sm:$0xf]
    %v519 = vunpack.c.l.b16 %v347
    %v520 = vunpack.c.l.b16 %v348
    %v521 = vunpack.c.l.b16 %v349
    %v522 = vunpack.c.l.b16 %v350
    %v523 = vunpack.c.l.b16 %v351
    %v524 = vunpack.c.l.b16 %v352
    %v525 = vunpack.c.l.b16 %v353
    %v526 = vunpack.c.l.b16 %v354
    %v527 = vunpack.c.l.b16 %v355
    %v528 = vunpack.c.l.b16 %v356
    %v529 = vunpack.c.l.b16 %v357
    %v530 = vunpack.c.l.b16 %v358
    %v531 = vunpack.c.l.b16 %v359
    %v532 = vunpack.c.l.b16 %v360
    %v533 = vunpack.c.l.b16 %v361
    %v534 = vunpack.c.l.b16 %v362
    %v535 = vpack.c.b16 %v520, %v519
    %v536 = vpack.c.b16 %v522, %v521
    %v537 = vpack.c.b16 %v524, %v523
    %v538 = vpack.c.b16 %v526, %v525
    %v539 = vpack.c.b16 %v528, %v527
    %v540 = vpack.c.b16 %v530, %v529
    %v541 = vpack.c.b16 %v532, %v531
    %v542 = vpack.c.b16 %v534, %v533
    %v547 = vunpack.c.l.b16 %v499
    %v548 = vunpack.c.l.b16 %v500
    %v549 = vunpack.c.l.b16 %v501
    %v550 = vunpack.c.l.b16 %v502
    %v551 = vpack.c.b16 %v548, %v547
    %v552 = vpack.c.b16 %v550, %v549
    %v556 = vsel %vm387, %v535, 0
    %v559 = vsel %vm387, %v536, 0
    %v562 = vsel %vm387, %v537, 0
    %v565 = vsel %vm387, %v538, 0
    %v568 = vsel %vm387, %v539, 0
    %v571 = vsel %vm387, %v540, 0
    %v574 = vsel %vm387, %v541, 0
    %v577 = vsel %vm387, %v542, 0
    %579 = vmatprep.subr.bf16.mxu0 0
    %580 = vmatpush1.bf16.msra.mxu0 0
    %581 = vmatprep.subr.bf16.mxu0 0
    %582 = vmatpush1.bf16.msra.mxu0 0
    %583 = vmatprep.subr.bf16.mxu0 0
    %584 = vmatpush1.bf16.msra.mxu0 0
    %585 = vmatprep.subr.bf16.mxu0 0
    %586 = vmatpush1.bf16.msra.mxu0 0
    %587 = vmatprep.subr.bf16.mxu0 0
    %588 = vmatpush1.bf16.msra.mxu0 0
    %589 = vmatprep.subr.bf16.mxu0 0
    %590 = vmatpush1.bf16.msra.mxu0 0
    %591 = vmatprep.subr.bf16.mxu0 0
    %592 = vmatpush1.bf16.msra.mxu0 %v552
    %593 = vmatprep.subr.bf16.mxu0 0
    %594 = vmatpush1.bf16.msra.mxu0 %v551
    %595 = vmatprep.subr.bf16.mxu0 0
    %596 = vmatpush2.bf16.msra.mxu0 0
    %597 = vmatprep.subr.bf16.mxu0 0
    %598 = vmatpush2.bf16.msra.mxu0 0
    %599 = vmatprep.subr.bf16.mxu0 0
    %600 = vmatpush2.bf16.msra.mxu0 0
    %601 = vmatprep.subr.bf16.mxu0 0
    %602 = vmatpush2.bf16.msra.mxu0 0
    %603 = vmatprep.subr.bf16.mxu0 0
    %604 = vmatpush2.bf16.msra.mxu0 0
    %605 = vmatprep.subr.bf16.mxu0 0
    %606 = vmatpush2.bf16.msra.mxu0 0
    %607 = vmatprep.subr.bf16.mxu0 0
    %608 = vmatpush2.bf16.msra.mxu0 0
    %609 = vmatprep.subr.bf16.mxu0 0
    %610 = vmatpush2.bf16.msra.mxu0 0
    %611 = vmatprep.mubr.bf16.mxu0 0
    %612 = vmatmul.mubr.bf16.gmra.mxu0 %v556
    %v613 = vpop.f32.mrf.mxu0
    %v614 = vadd.f32 0.0, %v613
    %v615 = vpop.f32.mrf.mxu0
    %v616 = vpop.f32.mrf.mxu0
    %v617 = vadd.f32 0.0, %v616
    %v618 = vpop.f32.mrf.mxu0
    %619 = vmatprep.mubr.bf16.mxu0 0
    %620 = vmatmul.mubr.bf16.gmra.mxu0 %v559
    %v621 = vpop.f32.mrf.mxu0
    %v622 = vadd.f32 0.0, %v621
    %v623 = vpop.f32.mrf.mxu0
    %v624 = vpop.f32.mrf.mxu0
    %v625 = vadd.f32 0.0, %v624
    %v626 = vpop.f32.mrf.mxu0
    %627 = vmatprep.mubr.bf16.mxu0 0
    %628 = vmatmul.mubr.bf16.gmra.mxu0 %v562
    %v629 = vpop.f32.mrf.mxu0
    %v630 = vadd.f32 0.0, %v629
    %v631 = vpop.f32.mrf.mxu0
    %v632 = vpop.f32.mrf.mxu0
    %v633 = vadd.f32 0.0, %v632
    %v634 = vpop.f32.mrf.mxu0
    %635 = vmatprep.mubr.bf16.mxu0 0
    %636 = vmatmul.mubr.bf16.gmra.mxu0 %v565
    %v637 = vpop.f32.mrf.mxu0
    %v638 = vadd.f32 0.0, %v637
    %v639 = vpop.f32.mrf.mxu0
    %v640 = vpop.f32.mrf.mxu0
    %v641 = vadd.f32 0.0, %v640
    %v642 = vpop.f32.mrf.mxu0
    %643 = vmatprep.mubr.bf16.mxu0 0
    %644 = vmatmul.mubr.bf16.gmra.mxu0 %v568
    %v645 = vpop.f32.mrf.mxu0
    %v646 = vadd.f32 0.0, %v645
    %v647 = vpop.f32.mrf.mxu0
    %v648 = vpop.f32.mrf.mxu0
    %v649 = vadd.f32 0.0, %v648
    %v650 = vpop.f32.mrf.mxu0
    %651 = vmatprep.mubr.bf16.mxu0 0
    %652 = vmatmul.mubr.bf16.gmra.mxu0 %v571
    %v653 = vpop.f32.mrf.mxu0
    %v654 = vadd.f32 0.0, %v653
    %v655 = vpop.f32.mrf.mxu0
    %v656 = vpop.f32.mrf.mxu0
    %v657 = vadd.f32 0.0, %v656
    %v658 = vpop.f32.mrf.mxu0
    %659 = vmatprep.mubr.bf16.mxu0 0
    %660 = vmatmul.mubr.bf16.gmra.mxu0 %v574
    %v661 = vpop.f32.mrf.mxu0
    %v662 = vadd.f32 0.0, %v661
    %v663 = vpop.f32.mrf.mxu0
    %v664 = vpop.f32.mrf.mxu0
    %v665 = vadd.f32 0.0, %v664
    %v666 = vpop.f32.mrf.mxu0
    %667 = vmatprep.mubr.bf16.mxu0 0
    %668 = vmatmul.mubr.bf16.gmra.mxu0 %v577
    %v669 = vpop.f32.mrf.mxu0
    %v670 = vadd.f32 0.0, %v669
    %v671 = vpop.f32.mrf.mxu0
    %v672 = vpop.f32.mrf.mxu0
    %v673 = vadd.f32 0.0, %v672
    %v674 = vpop.f32.mrf.mxu0
    %675 = vdwg.mxu0
    %v678 = vcombine.high %v426, %v426
    %v680 = vunpack.c.l.s4 1966171168
    %v681 = vunpack.c.0.s8 %v680
    %v682 = vlaneseq
    %v683 = vshrl.u32 %v682, 7
    %v684 = vsub.s32 %v681, %v683
    %v685 = vrot.slane %v426, %v684
    %v687 = vunpack.c.l.s4 1966171168
    %v688 = vunpack.c.0.s8 %v687
    %v689 = vlaneseq
    %v690 = vshrl.u32 %v689, 7
    %v691 = vsub.s32 %v688, %v690
    %v692 = vrot.slane %v678, %v691
    %v693 = vcombine.high %v685, %v685
    %v694 = vcombine.high %v692, %v692
    %v696 = vunpack.c.l.s4 1966171168
    %v697 = vunpack.c.0.s8 %v696
    %v698 = vlaneseq
    %v699 = vshrl.u32 %v698, 7
    %v700 = vsub.s32 %v697, %v699
    %v701 = vrot.slane %v685, %v700
    %v703 = vunpack.c.l.s4 1966171168
    %v704 = vunpack.c.0.s8 %v703
    %v705 = vlaneseq
    %v706 = vshrl.u32 %v705, 7
    %v707 = vsub.s32 %v704, %v706
    %v708 = vrot.slane %v692, %v707
    %v710 = vunpack.c.l.s4 1966171168
    %v711 = vunpack.c.0.s8 %v710
    %v712 = vlaneseq
    %v713 = vshrl.u32 %v712, 7
    %v714 = vsub.s32 %v711, %v713
    %v715 = vrot.slane %v693, %v714
    %v717 = vunpack.c.l.s4 1966171168
    %v718 = vunpack.c.0.s8 %v717
    %v719 = vlaneseq
    %v720 = vshrl.u32 %v719, 7
    %v721 = vsub.s32 %v718, %v720
    %v722 = vrot.slane %v694, %v721
    %v723 = vcombine.high %v701, %v701
    %v724 = vcombine.high %v708, %v708
    %v725 = vcombine.high %v715, %v715
    %v726 = vcombine.high %v722, %v722
    %v727 = vcombine.high %v429, %v429
    %v729 = vunpack.c.l.s4 1966171168
    %v730 = vunpack.c.0.s8 %v729
    %v731 = vlaneseq
    %v732 = vshrl.u32 %v731, 7
    %v733 = vsub.s32 %v730, %v732
    %v734 = vrot.slane %v429, %v733
    %v736 = vunpack.c.l.s4 1966171168
    %v737 = vunpack.c.0.s8 %v736
    %v738 = vlaneseq
    %v739 = vshrl.u32 %v738, 7
    %v740 = vsub.s32 %v737, %v739
    %v741 = vrot.slane %v727, %v740
    %v742 = vcombine.high %v734, %v734
    %v743 = vcombine.high %v741, %v741
    %v745 = vunpack.c.l.s4 1966171168
    %v746 = vunpack.c.0.s8 %v745
    %v747 = vlaneseq
    %v748 = vshrl.u32 %v747, 7
    %v749 = vsub.s32 %v746, %v748
    %v750 = vrot.slane %v734, %v749
    %v752 = vunpack.c.l.s4 1966171168
    %v753 = vunpack.c.0.s8 %v752
    %v754 = vlaneseq
    %v755 = vshrl.u32 %v754, 7
    %v756 = vsub.s32 %v753, %v755
    %v757 = vrot.slane %v741, %v756
    %v759 = vunpack.c.l.s4 1966171168
    %v760 = vunpack.c.0.s8 %v759
    %v761 = vlaneseq
    %v762 = vshrl.u32 %v761, 7
    %v763 = vsub.s32 %v760, %v762
    %v764 = vrot.slane %v742, %v763
    %v766 = vunpack.c.l.s4 1966171168
    %v767 = vunpack.c.0.s8 %v766
    %v768 = vlaneseq
    %v769 = vshrl.u32 %v768, 7
    %v770 = vsub.s32 %v767, %v769
    %v771 = vrot.slane %v743, %v770
    %v772 = vcombine.high %v750, %v750
    %v773 = vcombine.high %v757, %v757
    %v774 = vcombine.high %v764, %v764
    %v775 = vcombine.high %v771, %v771
    %v776 = vlaneseq
    %v777 = vshrl.u32 %v776, 7
    %v778 = vsub.s32 0, %v777
    %v779 = vrot.slane %v701, %v778
    %v780 = vlaneseq
    %v781 = vshrl.u32 %v780, 7
    %v782 = vsub.s32 0, %v781
    %v783 = vrot.slane %v715, %v782
    %v784 = vlaneseq
    %v785 = vshrl.u32 %v784, 7
    %v786 = vsub.s32 0, %v785
    %v787 = vrot.slane %v723, %v786
    %v788 = vlaneseq
    %v789 = vshrl.u32 %v788, 7
    %v790 = vsub.s32 0, %v789
    %v791 = vrot.slane %v725, %v790
    %v792 = vlaneseq
    %v793 = vshrl.u32 %v792, 7
    %v794 = vsub.s32 0, %v793
    %v795 = vrot.slane %v708, %v794
    %v796 = vlaneseq
    %v797 = vshrl.u32 %v796, 7
    %v798 = vsub.s32 0, %v797
    %v799 = vrot.slane %v722, %v798
    %v800 = vlaneseq
    %v801 = vshrl.u32 %v800, 7
    %v802 = vsub.s32 0, %v801
    %v803 = vrot.slane %v724, %v802
    %v804 = vlaneseq
    %v805 = vshrl.u32 %v804, 7
    %v806 = vsub.s32 0, %v805
    %v807 = vrot.slane %v726, %v806
    %v808 = vlaneseq
    %v809 = vshrl.u32 %v808, 7
    %v810 = vsub.s32 0, %v809
    %v811 = vrot.slane %v750, %v810
    %v812 = vlaneseq
    %v813 = vshrl.u32 %v812, 7
    %v814 = vsub.s32 0, %v813
    %v815 = vrot.slane %v764, %v814
    %v816 = vlaneseq
    %v817 = vshrl.u32 %v816, 7
    %v818 = vsub.s32 0, %v817
    %v819 = vrot.slane %v772, %v818
    %v820 = vlaneseq
    %v821 = vshrl.u32 %v820, 7
    %v822 = vsub.s32 0, %v821
    %v823 = vrot.slane %v774, %v822
    %v824 = vlaneseq
    %v825 = vshrl.u32 %v824, 7
    %v826 = vsub.s32 0, %v825
    %v827 = vrot.slane %v757, %v826
    %v828 = vlaneseq
    %v829 = vshrl.u32 %v828, 7
    %v830 = vsub.s32 0, %v829
    %v831 = vrot.slane %v771, %v830
    %v832 = vlaneseq
    %v833 = vshrl.u32 %v832, 7
    %v834 = vsub.s32 0, %v833
    %v835 = vrot.slane %v773, %v834
    %v836 = vlaneseq
    %v837 = vshrl.u32 %v836, 7
    %v838 = vsub.s32 0, %v837
    %v839 = vrot.slane %v775, %v838
    %v856 = vadd.f32 %v614, %v779
    %v857 = vadd.f32 %v617, %v783
    %v858 = vadd.f32 %v622, %v787
    %v859 = vadd.f32 %v625, %v791
    %v860 = vadd.f32 %v630, %v795
    %v861 = vadd.f32 %v633, %v799
    %v862 = vadd.f32 %v638, %v803
    %v863 = vadd.f32 %v641, %v807
    %v864 = vadd.f32 %v646, %v811
    %v865 = vadd.f32 %v649, %v815
    %v866 = vadd.f32 %v654, %v819
    %v867 = vadd.f32 %v657, %v823
    %v868 = vadd.f32 %v662, %v827
    %v869 = vadd.f32 %v665, %v831
    %v870 = vadd.f32 %v670, %v835
    %v871 = vadd.f32 %v673, %v839
    %v872 = vadd.f32 %v856, %v492
    %v873 = vadd.f32 %v857, %v492
    %v874 = vadd.f32 %v858, %v492
    %v875 = vadd.f32 %v859, %v492
    %v876 = vadd.f32 %v860, %v492
    %v877 = vadd.f32 %v861, %v492
    %v878 = vadd.f32 %v862, %v492
    %v879 = vadd.f32 %v863, %v492
    %v880 = vadd.f32 %v864, %v495
    %v881 = vadd.f32 %v865, %v495
    %v882 = vadd.f32 %v866, %v495
    %v883 = vadd.f32 %v867, %v495
    %v884 = vadd.f32 %v868, %v495
    %v885 = vadd.f32 %v869, %v495
    %v886 = vadd.f32 %v870, %v495
    %v887 = vadd.f32 %v871, %v495
    %v888 = vpack.c.bf16 %v872, %v872
    %v889 = vpack.c.bf16 %v873, %v873
    %v890 = vpack.c.bf16 %v874, %v874
    %v891 = vpack.c.bf16 %v875, %v875
    %v892 = vpack.c.bf16 %v876, %v876
    %v893 = vpack.c.bf16 %v877, %v877
    %v894 = vpack.c.bf16 %v878, %v878
    %v895 = vpack.c.bf16 %v879, %v879
    %v896 = vpack.c.bf16 %v880, %v880
    %v897 = vpack.c.bf16 %v881, %v881
    %v898 = vpack.c.bf16 %v882, %v882
    %v899 = vpack.c.bf16 %v883, %v883
    %v900 = vpack.c.bf16 %v884, %v884
    %v901 = vpack.c.bf16 %v885, %v885
    %v902 = vpack.c.bf16 %v886, %v886
    %v903 = vpack.c.bf16 %v887, %v887
    %v904 = vxor.u32 %v888, 2147516416
    %v905 = vxor.u32 %v889, 2147516416
    %v906 = vxor.u32 %v890, 2147516416
    %v907 = vxor.u32 %v891, 2147516416
    %v908 = vxor.u32 %v892, 2147516416
    %v909 = vxor.u32 %v893, 2147516416
    %v910 = vxor.u32 %v894, 2147516416
    %v911 = vxor.u32 %v895, 2147516416
    %v912 = vxor.u32 %v896, 2147516416
    %v913 = vxor.u32 %v897, 2147516416
    %v914 = vxor.u32 %v898, 2147516416
    %v915 = vxor.u32 %v899, 2147516416
    %v916 = vxor.u32 %v900, 2147516416
    %v917 = vxor.u32 %v901, 2147516416
    %v918 = vxor.u32 %v902, 2147516416
    %v919 = vxor.u32 %v903, 2147516416
    %v921 = vmul.bf16 %v904, 1069105081
    %v922 = vpow.bf16.pop %v921
    %v924 = vmul.bf16 %v905, 1069105081
    %v925 = vpow.bf16.pop %v924
    %v927 = vmul.bf16 %v906, 1069105081
    %v928 = vpow.bf16.pop %v927
    %v930 = vmul.bf16 %v907, 1069105081
    %v931 = vpow.bf16.pop %v930
    %v933 = vmul.bf16 %v908, 1069105081
    %v934 = vpow.bf16.pop %v933
    %v936 = vmul.bf16 %v909, 1069105081
    %v937 = vpow.bf16.pop %v936
    %v939 = vmul.bf16 %v910, 1069105081
    %v940 = vpow.bf16.pop %v939
    %v942 = vmul.bf16 %v911, 1069105081
    %v943 = vpow.bf16.pop %v942
    %v945 = vmul.bf16 %v912, 1069105081
    %v946 = vpow.bf16.pop %v945
    %v948 = vmul.bf16 %v913, 1069105081
    %v949 = vpow.bf16.pop %v948
    %v951 = vmul.bf16 %v914, 1069105081
    %v952 = vpow.bf16.pop %v951
    %v954 = vmul.bf16 %v915, 1069105081
    %v955 = vpow.bf16.pop %v954
    %v957 = vmul.bf16 %v916, 1069105081
    %v958 = vpow.bf16.pop %v957
    %v960 = vmul.bf16 %v917, 1069105081
    %v961 = vpow.bf16.pop %v960
    %v963 = vmul.bf16 %v918, 1069105081
    %v964 = vpow.bf16.pop %v963
    %v966 = vmul.bf16 %v919, 1069105081
    %v967 = vpow.bf16.pop %v966
    %v968 = vadd.bf16 %v922, 1065369472
    %v969 = vadd.bf16 %v925, 1065369472
    %v970 = vadd.bf16 %v928, 1065369472
    %v971 = vadd.bf16 %v931, 1065369472
    %v972 = vadd.bf16 %v934, 1065369472
    %v973 = vadd.bf16 %v937, 1065369472
    %v974 = vadd.bf16 %v940, 1065369472
    %v975 = vadd.bf16 %v943, 1065369472
    %v976 = vadd.bf16 %v946, 1065369472
    %v977 = vadd.bf16 %v949, 1065369472
    %v978 = vadd.bf16 %v952, 1065369472
    %v979 = vadd.bf16 %v955, 1065369472
    %v980 = vadd.bf16 %v958, 1065369472
    %v981 = vadd.bf16 %v961, 1065369472
    %v982 = vadd.bf16 %v964, 1065369472
    %v983 = vadd.bf16 %v967, 1065369472
    %v984 = vrcp.bf16.pop %v968
    %v985 = vmul.bf16 1065369472, %v984
    %v986 = vrcp.bf16.pop %v969
    %v987 = vmul.bf16 1065369472, %v986
    %v988 = vrcp.bf16.pop %v970
    %v989 = vmul.bf16 1065369472, %v988
    %v990 = vrcp.bf16.pop %v971
    %v991 = vmul.bf16 1065369472, %v990
    %v992 = vrcp.bf16.pop %v972
    %v993 = vmul.bf16 1065369472, %v992
    %v994 = vrcp.bf16.pop %v973
    %v995 = vmul.bf16 1065369472, %v994
    %v996 = vrcp.bf16.pop %v974
    %v997 = vmul.bf16 1065369472, %v996
    %v998 = vrcp.bf16.pop %v975
    %v999 = vmul.bf16 1065369472, %v998
    %v1000 = vrcp.bf16.pop %v976
    %v1001 = vmul.bf16 1065369472, %v1000
    %v1002 = vrcp.bf16.pop %v977
    %v1003 = vmul.bf16 1065369472, %v1002
    %v1004 = vrcp.bf16.pop %v978
    %v1005 = vmul.bf16 1065369472, %v1004
    %v1006 = vrcp.bf16.pop %v979
    %v1007 = vmul.bf16 1065369472, %v1006
    %v1008 = vrcp.bf16.pop %v980
    %v1009 = vmul.bf16 1065369472, %v1008
    %v1010 = vrcp.bf16.pop %v981
    %v1011 = vmul.bf16 1065369472, %v1010
    %v1012 = vrcp.bf16.pop %v982
    %v1013 = vmul.bf16 1065369472, %v1012
    %v1014 = vrcp.bf16.pop %v983
    %v1015 = vmul.bf16 1065369472, %v1014
    %v1016 = vld [vmem:[#allocation8] sm:$0xf]
    %v1017 = vld [vmem:[#allocation8 + $0x4] sm:$0xf]
    %v1018 = vld [vmem:[#allocation8 + $0x8] sm:$0xf]
    %v1019 = vld [vmem:[#allocation8 + $0xc] sm:$0xf]
    %v1020 = vld [vmem:[#allocation8 + $0x10] sm:$0xf]
    %v1021 = vld [vmem:[#allocation8 + $0x14] sm:$0xf]
    %v1022 = vld [vmem:[#allocation8 + $0x18] sm:$0xf]
    %v1023 = vld [vmem:[#allocation8 + $0x1c] sm:$0xf]
    %v1024 = vld [vmem:[#allocation8 + $0x20] sm:$0xf]
    %v1025 = vld [vmem:[#allocation8 + $0x24] sm:$0xf]
    %v1026 = vld [vmem:[#allocation8 + $0x28] sm:$0xf]
    %v1027 = vld [vmem:[#allocation8 + $0x2c] sm:$0xf]
    %v1028 = vld [vmem:[#allocation8 + $0x30] sm:$0xf]
    %v1029 = vld [vmem:[#allocation8 + $0x34] sm:$0xf]
    %v1030 = vld [vmem:[#allocation8 + $0x38] sm:$0xf]
    %v1031 = vld [vmem:[#allocation8 + $0x3c] sm:$0xf]
    %v1032 = vld [vmem:[%s5 + $0x1] sm:$0x1]
    %v1033 = vlaneseq
    %v1034 = vshrl.u32 %v1033, 7
    %v1035 = vsub.s32 0, %v1034
    %v1036 = vrot.slane %v1032, %v1035
    %v1053 = vunpack.c.l.b16 %v985
    %v1054 = vunpack.c.l.b16 %v987
    %v1055 = vunpack.c.l.b16 %v989
    %v1056 = vunpack.c.l.b16 %v991
    %v1057 = vunpack.c.l.b16 %v993
    %v1058 = vunpack.c.l.b16 %v995
    %v1059 = vunpack.c.l.b16 %v997
    %v1060 = vunpack.c.l.b16 %v999
    %v1061 = vunpack.c.l.b16 %v1001
    %v1062 = vunpack.c.l.b16 %v1003
    %v1063 = vunpack.c.l.b16 %v1005
    %v1064 = vunpack.c.l.b16 %v1007
    %v1065 = vunpack.c.l.b16 %v1009
    %v1066 = vunpack.c.l.b16 %v1011
    %v1067 = vunpack.c.l.b16 %v1013
    %v1068 = vunpack.c.l.b16 %v1015
    %v1069 = vpack.c.b16 %v1054, %v1053
    %v1070 = vpack.c.b16 %v1056, %v1055
    %v1071 = vpack.c.b16 %v1058, %v1057
    %v1072 = vpack.c.b16 %v1060, %v1059
    %v1073 = vpack.c.b16 %v1062, %v1061
    %v1074 = vpack.c.b16 %v1064, %v1063
    %v1075 = vpack.c.b16 %v1066, %v1065
    %v1076 = vpack.c.b16 %v1068, %v1067
    %v1101 = vunpack.c.l.b16 %v1016
    %v1102 = vunpack.c.l.b16 %v1017
    %v1103 = vunpack.c.l.b16 %v1018
    %v1104 = vunpack.c.l.b16 %v1019
    %v1105 = vunpack.c.l.b16 %v1020
    %v1106 = vunpack.c.l.b16 %v1021
    %v1107 = vunpack.c.l.b16 %v1022
    %v1108 = vunpack.c.l.b16 %v1023
    %v1109 = vunpack.c.l.b16 %v1024
    %v1110 = vunpack.c.l.b16 %v1025
    %v1111 = vunpack.c.l.b16 %v1026
    %v1112 = vunpack.c.l.b16 %v1027
    %v1113 = vunpack.c.l.b16 %v1028
    %v1114 = vunpack.c.l.b16 %v1029
    %v1115 = vunpack.c.l.b16 %v1030
    %v1116 = vunpack.c.l.b16 %v1031
    %v1117 = vpack.c.b16 %v1102, %v1101
    %v1118 = vpack.c.b16 %v1104, %v1103
    %v1119 = vpack.c.b16 %v1106, %v1105
    %v1120 = vpack.c.b16 %v1108, %v1107
    %v1121 = vpack.c.b16 %v1110, %v1109
    %v1122 = vpack.c.b16 %v1112, %v1111
    %v1123 = vpack.c.b16 %v1114, %v1113
    %v1124 = vpack.c.b16 %v1116, %v1115
    %1133 = vmatprep.subr.bf16.mxu0 0
    %1134 = vmatpush1.bf16.msra.mxu0 %v1124
    %1135 = vmatprep.subr.bf16.mxu0 0
    %1136 = vmatpush1.bf16.msra.mxu0 %v1123
    %1137 = vmatprep.subr.bf16.mxu0 0
    %1138 = vmatpush1.bf16.msra.mxu0 %v1122
    %1139 = vmatprep.subr.bf16.mxu0 0
    %1140 = vmatpush1.bf16.msra.mxu0 %v1121
    %1141 = vmatprep.subr.bf16.mxu0 0
    %1142 = vmatpush1.bf16.msra.mxu0 %v1120
    %1143 = vmatprep.subr.bf16.mxu0 0
    %1144 = vmatpush1.bf16.msra.mxu0 %v1119
    %1145 = vmatprep.subr.bf16.mxu0 0
    %1146 = vmatpush1.bf16.msra.mxu0 %v1118
    %1147 = vmatprep.subr.bf16.mxu0 0
    %1148 = vmatpush1.bf16.msra.mxu0 %v1117
    %1149 = vmatprep.subr.bf16.mxu0 0
    %1150 = vmatpush2.bf16.msra.mxu0 0
    %1151 = vmatprep.subr.bf16.mxu0 0
    %1152 = vmatpush2.bf16.msra.mxu0 0
    %1153 = vmatprep.subr.bf16.mxu0 0
    %1154 = vmatpush2.bf16.msra.mxu0 0
    %1155 = vmatprep.subr.bf16.mxu0 0
    %1156 = vmatpush2.bf16.msra.mxu0 0
    %1157 = vmatprep.subr.bf16.mxu0 0
    %1158 = vmatpush2.bf16.msra.mxu0 0
    %1159 = vmatprep.subr.bf16.mxu0 0
    %1160 = vmatpush2.bf16.msra.mxu0 0
    %1161 = vmatprep.subr.bf16.mxu0 0
    %1162 = vmatpush2.bf16.msra.mxu0 0
    %1163 = vmatprep.subr.bf16.mxu0 0
    %1164 = vmatpush2.bf16.msra.mxu0 0
    %1165 = vmatprep.mubr.bf16.mxu0 0
    %1166 = vmatmul.mubr.bf16.gmra.mxu0 %v1069
    %v1167 = vpop.f32.mrf.mxu0
    %v1168 = vadd.f32 %v1036, %v1167
    %v1169 = vpop.f32.mrf.mxu0
    %v1170 = vpop.f32.mrf.mxu0
    %v1171 = vadd.f32 %v1036, %v1170
    %v1172 = vpop.f32.mrf.mxu0
    %1173 = vmatprep.mubr.bf16.mxu0 0
    %1174 = vmatmul.mubr.bf16.gmra.mxu0 %v1070
    %v1175 = vpop.f32.mrf.mxu0
    %v1176 = vadd.f32 %v1036, %v1175
    %v1177 = vpop.f32.mrf.mxu0
    %v1178 = vpop.f32.mrf.mxu0
    %v1179 = vadd.f32 %v1036, %v1178
    %v1180 = vpop.f32.mrf.mxu0
    %1181 = vmatprep.mubr.bf16.mxu0 0
    %1182 = vmatmul.mubr.bf16.gmra.mxu0 %v1071
    %v1183 = vpop.f32.mrf.mxu0
    %v1184 = vadd.f32 %v1036, %v1183
    %v1185 = vpop.f32.mrf.mxu0
    %v1186 = vpop.f32.mrf.mxu0
    %v1187 = vadd.f32 %v1036, %v1186
    %v1188 = vpop.f32.mrf.mxu0
    %1189 = vmatprep.mubr.bf16.mxu0 0
    %1190 = vmatmul.mubr.bf16.gmra.mxu0 %v1072
    %v1191 = vpop.f32.mrf.mxu0
    %v1192 = vadd.f32 %v1036, %v1191
    %v1193 = vpop.f32.mrf.mxu0
    %v1194 = vpop.f32.mrf.mxu0
    %v1195 = vadd.f32 %v1036, %v1194
    %v1196 = vpop.f32.mrf.mxu0
    %1197 = vmatprep.mubr.bf16.mxu0 0
    %1198 = vmatmul.mubr.bf16.gmra.mxu0 %v1073
    %v1199 = vpop.f32.mrf.mxu0
    %v1200 = vadd.f32 %v1036, %v1199
    %v1201 = vpop.f32.mrf.mxu0
    %v1202 = vpop.f32.mrf.mxu0
    %v1203 = vadd.f32 %v1036, %v1202
    %v1204 = vpop.f32.mrf.mxu0
    %1205 = vmatprep.mubr.bf16.mxu0 0
    %1206 = vmatmul.mubr.bf16.gmra.mxu0 %v1074
    %v1207 = vpop.f32.mrf.mxu0
    %v1208 = vadd.f32 %v1036, %v1207
    %v1209 = vpop.f32.mrf.mxu0
    %v1210 = vpop.f32.mrf.mxu0
    %v1211 = vadd.f32 %v1036, %v1210
    %v1212 = vpop.f32.mrf.mxu0
    %1213 = vmatprep.mubr.bf16.mxu0 0
    %1214 = vmatmul.mubr.bf16.gmra.mxu0 %v1075
    %v1215 = vpop.f32.mrf.mxu0
    %v1216 = vadd.f32 %v1036, %v1215
    %v1217 = vpop.f32.mrf.mxu0
    %v1218 = vpop.f32.mrf.mxu0
    %v1219 = vadd.f32 %v1036, %v1218
    %v1220 = vpop.f32.mrf.mxu0
    %1221 = vmatprep.mubr.bf16.mxu0 0
    %1222 = vmatmul.mubr.bf16.gmra.mxu0 %v1076
    %v1223 = vpop.f32.mrf.mxu0
    %v1224 = vadd.f32 %v1036, %v1223
    %v1225 = vpop.f32.mrf.mxu0
    %v1226 = vpop.f32.mrf.mxu0
    %v1227 = vadd.f32 %v1036, %v1226
    %v1228 = vpop.f32.mrf.mxu0
    %1229 = vdwg.mxu0
    %v1230 = vxor.u32 %v1168, 2147483648
    %v1231 = vxor.u32 %v1171, 2147483648
    %v1232 = vxor.u32 %v1176, 2147483648
    %v1233 = vxor.u32 %v1179, 2147483648
    %v1234 = vxor.u32 %v1184, 2147483648
    %v1235 = vxor.u32 %v1187, 2147483648
    %v1236 = vxor.u32 %v1192, 2147483648
    %v1237 = vxor.u32 %v1195, 2147483648
    %v1238 = vxor.u32 %v1200, 2147483648
    %v1239 = vxor.u32 %v1203, 2147483648
    %v1240 = vxor.u32 %v1208, 2147483648
    %v1241 = vxor.u32 %v1211, 2147483648
    %v1242 = vxor.u32 %v1216, 2147483648
    %v1243 = vxor.u32 %v1219, 2147483648
    %v1244 = vxor.u32 %v1224, 2147483648
    %v1245 = vxor.u32 %v1227, 2147483648
    %v1246 = vmul.f32 %v1230, 1.442695
    %v1247 = vpow.pop %v1246
    %v1248 = vmul.f32 %v1231, 1.442695
    %v1249 = vpow.pop %v1248
    %v1250 = vmul.f32 %v1232, 1.442695
    %v1251 = vpow.pop %v1250
    %v1252 = vmul.f32 %v1233, 1.442695
    %v1253 = vpow.pop %v1252
    %v1254 = vmul.f32 %v1234, 1.442695
    %v1255 = vpow.pop %v1254
    %v1256 = vmul.f32 %v1235, 1.442695
    %v1257 = vpow.pop %v1256
    %v1258 = vmul.f32 %v1236, 1.442695
    %v1259 = vpow.pop %v1258
    %v1260 = vmul.f32 %v1237, 1.442695
    %v1261 = vpow.pop %v1260
    %v1262 = vmul.f32 %v1238, 1.442695
    %v1263 = vpow.pop %v1262
    %v1264 = vmul.f32 %v1239, 1.442695
    %v1265 = vpow.pop %v1264
    %v1266 = vmul.f32 %v1240, 1.442695
    %v1267 = vpow.pop %v1266
    %v1268 = vmul.f32 %v1241, 1.442695
    %v1269 = vpow.pop %v1268
    %v1270 = vmul.f32 %v1242, 1.442695
    %v1271 = vpow.pop %v1270
    %v1272 = vmul.f32 %v1243, 1.442695
    %v1273 = vpow.pop %v1272
    %v1274 = vmul.f32 %v1244, 1.442695
    %v1275 = vpow.pop %v1274
    %v1276 = vmul.f32 %v1245, 1.442695
    %v1277 = vpow.pop %v1276
    %v1278 = vadd.f32 %v1247, 1.0
    %v1279 = vadd.f32 %v1249, 1.0
    %v1280 = vadd.f32 %v1251, 1.0
    %v1281 = vadd.f32 %v1253, 1.0
    %v1282 = vadd.f32 %v1255, 1.0
    %v1283 = vadd.f32 %v1257, 1.0
    %v1284 = vadd.f32 %v1259, 1.0
    %v1285 = vadd.f32 %v1261, 1.0
    %v1286 = vadd.f32 %v1263, 1.0
    %v1287 = vadd.f32 %v1265, 1.0
    %v1288 = vadd.f32 %v1267, 1.0
    %v1289 = vadd.f32 %v1269, 1.0
    %v1290 = vadd.f32 %v1271, 1.0
    %v1291 = vadd.f32 %v1273, 1.0
    %v1292 = vadd.f32 %v1275, 1.0
    %v1293 = vadd.f32 %v1277, 1.0
    %v1294 = vrcp.pop %v1278
    %v1295 = vmul.f32 1.0, %v1294
    %v1296 = vrcp.pop %v1279
    %v1297 = vmul.f32 1.0, %v1296
    %v1298 = vrcp.pop %v1280
    %v1299 = vmul.f32 1.0, %v1298
    %v1300 = vrcp.pop %v1281
    %v1301 = vmul.f32 1.0, %v1300
    %v1302 = vrcp.pop %v1282
    %v1303 = vmul.f32 1.0, %v1302
    %v1304 = vrcp.pop %v1283
    %v1305 = vmul.f32 1.0, %v1304
    %v1306 = vrcp.pop %v1284
    %v1307 = vmul.f32 1.0, %v1306
    %v1308 = vrcp.pop %v1285
    %v1309 = vmul.f32 1.0, %v1308
    %v1310 = vrcp.pop %v1286
    %v1311 = vmul.f32 1.0, %v1310
    %v1312 = vrcp.pop %v1287
    %v1313 = vmul.f32 1.0, %v1312
    %v1314 = vrcp.pop %v1288
    %v1315 = vmul.f32 1.0, %v1314
    %v1316 = vrcp.pop %v1289
    %v1317 = vmul.f32 1.0, %v1316
    %v1318 = vrcp.pop %v1290
    %v1319 = vmul.f32 1.0, %v1318
    %v1320 = vrcp.pop %v1291
    %v1321 = vmul.f32 1.0, %v1320
    %v1322 = vrcp.pop %v1292
    %v1323 = vmul.f32 1.0, %v1322
    %v1324 = vrcp.pop %v1293
    %v1325 = vmul.f32 1.0, %v1324
    %v1326 = vld [vmem:[%s4] sm:$0x1]
    %v1328 = vlaneseq
    %v1329 = vshrl.u32 %v1328, 7
    %v1330 = vsub.s32 0, %v1329
    %v1331 = vrot.slane %v1326, %v1330
    %v1333 = vmul.f32 %v1295, %v1331
    %v1334 = vmul.f32 %v1297, %v1331
    %v1335 = vmul.f32 %v1299, %v1331
    %v1336 = vmul.f32 %v1301, %v1331
    %v1337 = vmul.f32 %v1303, %v1331
    %v1338 = vmul.f32 %v1305, %v1331
    %v1339 = vmul.f32 %v1307, %v1331
    %v1340 = vmul.f32 %v1309, %v1331
    %v1341 = vmul.f32 %v1311, %v1331
    %v1342 = vmul.f32 %v1313, %v1331
    %v1343 = vmul.f32 %v1315, %v1331
    %v1344 = vmul.f32 %v1317, %v1331
    %v1345 = vmul.f32 %v1319, %v1331
    %v1346 = vmul.f32 %v1321, %v1331
    %v1347 = vmul.f32 %v1323, %v1331
    %v1348 = vmul.f32 %v1325, %v1331
    %1349 = vadd.xlane.f32.xlu0 %v1333
    %v1350 = vpop.xlane.xlu0 %1349
    %1351 = vadd.xlane.f32.xlu0 %v1334
    %v1352 = vpop.xlane.xlu0 %1351
    %1353 = vadd.xlane.f32.xlu0 %v1335
    %v1354 = vpop.xlane.xlu0 %1353
    %1355 = vadd.xlane.f32.xlu0 %v1336
    %v1356 = vpop.xlane.xlu0 %1355
    %1357 = vadd.xlane.f32.xlu0 %v1337
    %v1358 = vpop.xlane.xlu0 %1357
    %1359 = vadd.xlane.f32.xlu0 %v1338
    %v1360 = vpop.xlane.xlu0 %1359
    %1361 = vadd.xlane.f32.xlu0 %v1339
    %v1362 = vpop.xlane.xlu0 %1361
    %1363 = vadd.xlane.f32.xlu0 %v1340
    %v1364 = vpop.xlane.xlu0 %1363
    %1365 = vadd.xlane.f32.xlu0 %v1341
    %v1366 = vpop.xlane.xlu0 %1365
    %1367 = vadd.xlane.f32.xlu0 %v1342
    %v1368 = vpop.xlane.xlu0 %1367
    %1369 = vadd.xlane.f32.xlu0 %v1343
    %v1370 = vpop.xlane.xlu0 %1369
    %1371 = vadd.xlane.f32.xlu0 %v1344
    %v1372 = vpop.xlane.xlu0 %1371
    %1373 = vadd.xlane.f32.xlu0 %v1345
    %v1374 = vpop.xlane.xlu0 %1373
    %1375 = vadd.xlane.f32.xlu0 %v1346
    %v1376 = vpop.xlane.xlu0 %1375
    %1377 = vadd.xlane.f32.xlu0 %v1347
    %v1378 = vpop.xlane.xlu0 %1377
    %1379 = vadd.xlane.f32.xlu0 %v1348
    %v1380 = vpop.xlane.xlu0 %1379
    %v1397 = vlaneseq
    %v1398 = vand.u32 %v1397, 127
    %v1399 = vlaneseq
    %v1400 = vshrl.u32 %v1399, 7
    %v1401 = vsub.s32 %v1398, %v1400
    %v1402 = vrot.slane %v1350, %v1401
    %v1403 = vlaneseq
    %v1404 = vshrl.u32 %v1403, 7
    %v1405 = vsub.s32 %v1398, %v1404
    %v1406 = vrot.slane %v1352, %v1405
    %v1407 = vlaneseq
    %v1408 = vshrl.u32 %v1407, 7
    %v1409 = vsub.s32 %v1398, %v1408
    %v1410 = vrot.slane %v1354, %v1409
    %v1411 = vlaneseq
    %v1412 = vshrl.u32 %v1411, 7
    %v1413 = vsub.s32 %v1398, %v1412
    %v1414 = vrot.slane %v1356, %v1413
    %v1415 = vlaneseq
    %v1416 = vshrl.u32 %v1415, 7
    %v1417 = vsub.s32 %v1398, %v1416
    %v1418 = vrot.slane %v1358, %v1417
    %v1419 = vlaneseq
    %v1420 = vshrl.u32 %v1419, 7
    %v1421 = vsub.s32 %v1398, %v1420
    %v1422 = vrot.slane %v1360, %v1421
    %v1423 = vlaneseq
    %v1424 = vshrl.u32 %v1423, 7
    %v1425 = vsub.s32 %v1398, %v1424
    %v1426 = vrot.slane %v1362, %v1425
    %v1427 = vlaneseq
    %v1428 = vshrl.u32 %v1427, 7
    %v1429 = vsub.s32 %v1398, %v1428
    %v1430 = vrot.slane %v1364, %v1429
    %v1431 = vlaneseq
    %v1432 = vshrl.u32 %v1431, 7
    %v1433 = vsub.s32 %v1398, %v1432
    %v1434 = vrot.slane %v1366, %v1433
    %v1435 = vlaneseq
    %v1436 = vshrl.u32 %v1435, 7
    %v1437 = vsub.s32 %v1398, %v1436
    %v1438 = vrot.slane %v1368, %v1437
    %v1439 = vlaneseq
    %v1440 = vshrl.u32 %v1439, 7
    %v1441 = vsub.s32 %v1398, %v1440
    %v1442 = vrot.slane %v1370, %v1441
    %v1443 = vlaneseq
    %v1444 = vshrl.u32 %v1443, 7
    %v1445 = vsub.s32 %v1398, %v1444
    %v1446 = vrot.slane %v1372, %v1445
    %v1447 = vlaneseq
    %v1448 = vshrl.u32 %v1447, 7
    %v1449 = vsub.s32 %v1398, %v1448
    %v1450 = vrot.slane %v1374, %v1449
    %v1451 = vlaneseq
    %v1452 = vshrl.u32 %v1451, 7
    %v1453 = vsub.s32 %v1398, %v1452
    %v1454 = vrot.slane %v1376, %v1453
    %v1455 = vlaneseq
    %v1456 = vshrl.u32 %v1455, 7
    %v1457 = vsub.s32 %v1398, %v1456
    %v1458 = vrot.slane %v1378, %v1457
    %v1459 = vlaneseq
    %v1460 = vshrl.u32 %v1459, 7
    %v1461 = vsub.s32 %v1398, %v1460
    %v1462 = vrot.slane %v1380, %v1461
    %vm1463 = vcmask 1041409
    %v1464 = vsel %vm1463, %v1406, %v1402
    %vm1465 = vcmask 1042434
    %v1466 = vsel %vm1465, %v1410, %v1464
    %vm1467 = vcmask 1043459
    %v1468 = vsel %vm1467, %v1414, %v1466
    %vm1469 = vcmask 1044484
    %v1470 = vsel %vm1469, %v1418, %v1468
    %vm1471 = vcmask 1045509
    %v1472 = vsel %vm1471, %v1422, %v1470
    %vm1473 = vcmask 1046534
    %v1474 = vsel %vm1473, %v1426, %v1472
    %vm1475 = vcmask 1047559
    %v1476 = vsel %vm1475, %v1430, %v1474
    %v1477 = vsel %vm1463, %v1438, %v1434
    %v1478 = vsel %vm1465, %v1442, %v1477
    %v1479 = vsel %vm1467, %v1446, %v1478
    %v1480 = vsel %vm1469, %v1450, %v1479
    %v1481 = vsel %vm1471, %v1454, %v1480
    %v1482 = vsel %vm1473, %v1458, %v1481
    %v1483 = vsel %vm1475, %v1462, %v1482
    %vm1486 = vcmask 64512
    %v1487 = vsel %vm1486, %v1476, -inf
    %1488 = vmax.xlane.f32.xlu0 %v1487
    %v1489 = vpop.xlane.xlu0 %1488
    %v1490 = vsel %vm1486, %v1483, -inf
    %1491 = vmax.xlane.f32.xlu0 %v1490
    %v1492 = vpop.xlane.xlu0 %1491
    %v1495 = vlaneseq
    %v1496 = vshrl.u32 %v1495, 7
    %v1497 = vsub.s32 0, %v1496
    %v1498 = vrot.slane %v1489, %v1497
    %v1499 = vlaneseq
    %v1500 = vshrl.u32 %v1499, 7
    %v1501 = vsub.s32 1, %v1500
    %v1502 = vrot.slane %v1489, %v1501
    %v1503 = vlaneseq
    %v1504 = vshrl.u32 %v1503, 7
    %v1505 = vsub.s32 2, %v1504
    %v1506 = vrot.slane %v1489, %v1505
    %v1507 = vlaneseq
    %v1508 = vshrl.u32 %v1507, 7
    %v1509 = vsub.s32 3, %v1508
    %v1510 = vrot.slane %v1489, %v1509
    %v1511 = vlaneseq
    %v1512 = vshrl.u32 %v1511, 7
    %v1513 = vsub.s32 4, %v1512
    %v1514 = vrot.slane %v1489, %v1513
    %v1515 = vlaneseq
    %v1516 = vshrl.u32 %v1515, 7
    %v1517 = vsub.s32 5, %v1516
    %v1518 = vrot.slane %v1489, %v1517
    %v1519 = vlaneseq
    %v1520 = vshrl.u32 %v1519, 7
    %v1521 = vsub.s32 6, %v1520
    %v1522 = vrot.slane %v1489, %v1521
    %v1523 = vlaneseq
    %v1524 = vshrl.u32 %v1523, 7
    %v1525 = vsub.s32 7, %v1524
    %v1526 = vrot.slane %v1489, %v1525
    %v1527 = vlaneseq
    %v1528 = vshrl.u32 %v1527, 7
    %v1529 = vsub.s32 0, %v1528
    %v1530 = vrot.slane %v1492, %v1529
    %v1531 = vlaneseq
    %v1532 = vshrl.u32 %v1531, 7
    %v1533 = vsub.s32 1, %v1532
    %v1534 = vrot.slane %v1492, %v1533
    %v1535 = vlaneseq
    %v1536 = vshrl.u32 %v1535, 7
    %v1537 = vsub.s32 2, %v1536
    %v1538 = vrot.slane %v1492, %v1537
    %v1539 = vlaneseq
    %v1540 = vshrl.u32 %v1539, 7
    %v1541 = vsub.s32 3, %v1540
    %v1542 = vrot.slane %v1492, %v1541
    %v1543 = vlaneseq
    %v1544 = vshrl.u32 %v1543, 7
    %v1545 = vsub.s32 4, %v1544
    %v1546 = vrot.slane %v1492, %v1545
    %v1547 = vlaneseq
    %v1548 = vshrl.u32 %v1547, 7
    %v1549 = vsub.s32 5, %v1548
    %v1550 = vrot.slane %v1492, %v1549
    %v1551 = vlaneseq
    %v1552 = vshrl.u32 %v1551, 7
    %v1553 = vsub.s32 6, %v1552
    %v1554 = vrot.slane %v1492, %v1553
    %v1555 = vlaneseq
    %v1556 = vshrl.u32 %v1555, 7
    %v1557 = vsub.s32 7, %v1556
    %v1558 = vrot.slane %v1492, %v1557
    %v1575 = vsub.f32 %v1350, %v1498
    %v1576 = vsub.f32 %v1352, %v1502
    %v1577 = vsub.f32 %v1354, %v1506
    %v1578 = vsub.f32 %v1356, %v1510
    %v1579 = vsub.f32 %v1358, %v1514
    %v1580 = vsub.f32 %v1360, %v1518
    %v1581 = vsub.f32 %v1362, %v1522
    %v1582 = vsub.f32 %v1364, %v1526
    %v1583 = vsub.f32 %v1366, %v1530
    %v1584 = vsub.f32 %v1368, %v1534
    %v1585 = vsub.f32 %v1370, %v1538
    %v1586 = vsub.f32 %v1372, %v1542
    %v1587 = vsub.f32 %v1374, %v1546
    %v1588 = vsub.f32 %v1376, %v1550
    %v1589 = vsub.f32 %v1378, %v1554
    %v1590 = vsub.f32 %v1380, %v1558
    %v1591 = vmul.f32 %v1575, 1.442695
    %v1592 = vpow.pop %v1591
    %v1593 = vmul.f32 %v1576, 1.442695
    %v1594 = vpow.pop %v1593
    %v1595 = vmul.f32 %v1577, 1.442695
    %v1596 = vpow.pop %v1595
    %v1597 = vmul.f32 %v1578, 1.442695
    %v1598 = vpow.pop %v1597
    %v1599 = vmul.f32 %v1579, 1.442695
    %v1600 = vpow.pop %v1599
    %v1601 = vmul.f32 %v1580, 1.442695
    %v1602 = vpow.pop %v1601
    %v1603 = vmul.f32 %v1581, 1.442695
    %v1604 = vpow.pop %v1603
    %v1605 = vmul.f32 %v1582, 1.442695
    %v1606 = vpow.pop %v1605
    %v1607 = vmul.f32 %v1583, 1.442695
    %v1608 = vpow.pop %v1607
    %v1609 = vmul.f32 %v1584, 1.442695
    %v1610 = vpow.pop %v1609
    %v1611 = vmul.f32 %v1585, 1.442695
    %v1612 = vpow.pop %v1611
    %v1613 = vmul.f32 %v1586, 1.442695
    %v1614 = vpow.pop %v1613
    %v1615 = vmul.f32 %v1587, 1.442695
    %v1616 = vpow.pop %v1615
    %v1617 = vmul.f32 %v1588, 1.442695
    %v1618 = vpow.pop %v1617
    %v1619 = vmul.f32 %v1589, 1.442695
    %v1620 = vpow.pop %v1619
    %v1621 = vmul.f32 %v1590, 1.442695
    %v1622 = vpow.pop %v1621
    %1639 = vset.pattern.permute.xlu0 0
    %1640 = vperm.xlu0 %1639, %v1592
    %v1641 = vpop.permute.xlu0 %1640
    %1642 = vset.pattern.permute.xlu0 0
    %1643 = vperm.xlu0 %1642, %v1594
    %v1644 = vpop.permute.xlu0 %1643
    %1645 = vset.pattern.permute.xlu0 0
    %1646 = vperm.xlu0 %1645, %v1596
    %v1647 = vpop.permute.xlu0 %1646
    %1648 = vset.pattern.permute.xlu0 0
    %1649 = vperm.xlu0 %1648, %v1598
    %v1650 = vpop.permute.xlu0 %1649
    %1651 = vset.pattern.permute.xlu0 0
    %1652 = vperm.xlu0 %1651, %v1600
    %v1653 = vpop.permute.xlu0 %1652
    %1654 = vset.pattern.permute.xlu0 0
    %1655 = vperm.xlu0 %1654, %v1602
    %v1656 = vpop.permute.xlu0 %1655
    %1657 = vset.pattern.permute.xlu0 0
    %1658 = vperm.xlu0 %1657, %v1604
    %v1659 = vpop.permute.xlu0 %1658
    %1660 = vset.pattern.permute.xlu0 0
    %1661 = vperm.xlu0 %1660, %v1606
    %v1662 = vpop.permute.xlu0 %1661
    %1663 = vset.pattern.permute.xlu0 0
    %1664 = vperm.xlu0 %1663, %v1608
    %v1665 = vpop.permute.xlu0 %1664
    %1666 = vset.pattern.permute.xlu0 0
    %1667 = vperm.xlu0 %1666, %v1610
    %v1668 = vpop.permute.xlu0 %1667
    %1669 = vset.pattern.permute.xlu0 0
    %1670 = vperm.xlu0 %1669, %v1612
    %v1671 = vpop.permute.xlu0 %1670
    %1672 = vset.pattern.permute.xlu0 0
    %1673 = vperm.xlu0 %1672, %v1614
    %v1674 = vpop.permute.xlu0 %1673
    %1675 = vset.pattern.permute.xlu0 0
    %1676 = vperm.xlu0 %1675, %v1616
    %v1677 = vpop.permute.xlu0 %1676
    %1678 = vset.pattern.permute.xlu0 0
    %1679 = vperm.xlu0 %1678, %v1618
    %v1680 = vpop.permute.xlu0 %1679
    %1681 = vset.pattern.permute.xlu0 0
    %1682 = vperm.xlu0 %1681, %v1620
    %v1683 = vpop.permute.xlu0 %1682
    %1684 = vset.pattern.permute.xlu0 0
    %1685 = vperm.xlu0 %1684, %v1622
    %v1686 = vpop.permute.xlu0 %1685
    %v1687 = vlaneseq
    %v1688 = vshrl.u32 %v1687, 7
    %v1689 = vsub.s32 %v1398, %v1688
    %v1690 = vrot.slane %v1641, %v1689
    %v1691 = vlaneseq
    %v1692 = vshrl.u32 %v1691, 7
    %v1693 = vsub.s32 %v1398, %v1692
    %v1694 = vrot.slane %v1644, %v1693
    %v1695 = vlaneseq
    %v1696 = vshrl.u32 %v1695, 7
    %v1697 = vsub.s32 %v1398, %v1696
    %v1698 = vrot.slane %v1647, %v1697
    %v1699 = vlaneseq
    %v1700 = vshrl.u32 %v1699, 7
    %v1701 = vsub.s32 %v1398, %v1700
    %v1702 = vrot.slane %v1650, %v1701
    %v1703 = vlaneseq
    %v1704 = vshrl.u32 %v1703, 7
    %v1705 = vsub.s32 %v1398, %v1704
    %v1706 = vrot.slane %v1653, %v1705
    %v1707 = vlaneseq
    %v1708 = vshrl.u32 %v1707, 7
    %v1709 = vsub.s32 %v1398, %v1708
    %v1710 = vrot.slane %v1656, %v1709
    %v1711 = vlaneseq
    %v1712 = vshrl.u32 %v1711, 7
    %v1713 = vsub.s32 %v1398, %v1712
    %v1714 = vrot.slane %v1659, %v1713
    %v1715 = vlaneseq
    %v1716 = vshrl.u32 %v1715, 7
    %v1717 = vsub.s32 %v1398, %v1716
    %v1718 = vrot.slane %v1662, %v1717
    %v1719 = vlaneseq
    %v1720 = vshrl.u32 %v1719, 7
    %v1721 = vsub.s32 %v1398, %v1720
    %v1722 = vrot.slane %v1665, %v1721
    %v1723 = vlaneseq
    %v1724 = vshrl.u32 %v1723, 7
    %v1725 = vsub.s32 %v1398, %v1724
    %v1726 = vrot.slane %v1668, %v1725
    %v1727 = vlaneseq
    %v1728 = vshrl.u32 %v1727, 7
    %v1729 = vsub.s32 %v1398, %v1728
    %v1730 = vrot.slane %v1671, %v1729
    %v1731 = vlaneseq
    %v1732 = vshrl.u32 %v1731, 7
    %v1733 = vsub.s32 %v1398, %v1732
    %v1734 = vrot.slane %v1674, %v1733
    %v1735 = vlaneseq
    %v1736 = vshrl.u32 %v1735, 7
    %v1737 = vsub.s32 %v1398, %v1736
    %v1738 = vrot.slane %v1677, %v1737
    %v1739 = vlaneseq
    %v1740 = vshrl.u32 %v1739, 7
    %v1741 = vsub.s32 %v1398, %v1740
    %v1742 = vrot.slane %v1680, %v1741
    %v1743 = vlaneseq
    %v1744 = vshrl.u32 %v1743, 7
    %v1745 = vsub.s32 %v1398, %v1744
    %v1746 = vrot.slane %v1683, %v1745
    %v1747 = vlaneseq
    %v1748 = vshrl.u32 %v1747, 7
    %v1749 = vsub.s32 %v1398, %v1748
    %v1750 = vrot.slane %v1686, %v1749
    %v1751 = vsel %vm1463, %v1694, %v1690
    %v1752 = vsel %vm1465, %v1698, %v1751
    %v1753 = vsel %vm1467, %v1702, %v1752
    %v1754 = vsel %vm1469, %v1706, %v1753
    %v1755 = vsel %vm1471, %v1710, %v1754
    %v1756 = vsel %vm1473, %v1714, %v1755
    %v1757 = vsel %vm1475, %v1718, %v1756
    %v1758 = vsel %vm1463, %v1726, %v1722
    %v1759 = vsel %vm1465, %v1730, %v1758
    %v1760 = vsel %vm1467, %v1734, %v1759
    %v1761 = vsel %vm1469, %v1738, %v1760
    %v1762 = vsel %vm1471, %v1742, %v1761
    %v1763 = vsel %vm1473, %v1746, %v1762
    %v1764 = vsel %vm1475, %v1750, %v1763
    %v1767 = vsel %vm1486, %v1757, 0.0
    %1768 = vadd.xlane.f32.xlu0 %v1767
    %v1769 = vpop.xlane.xlu0 %1768
    %v1770 = vsel %vm1486, %v1764, 0.0
    %1771 = vadd.xlane.f32.xlu0 %v1770
    %v1772 = vpop.xlane.xlu0 %1771
    %v1773 = vrcp.pop %v1769
    %v1774 = vrcp.pop %v1772
    %v1777 = vlaneseq
    %v1778 = vshrl.u32 %v1777, 7
    %v1779 = vsub.s32 0, %v1778
    %v1780 = vrot.slane %v1773, %v1779
    %v1781 = vlaneseq
    %v1782 = vshrl.u32 %v1781, 7
    %v1783 = vsub.s32 1, %v1782
    %v1784 = vrot.slane %v1773, %v1783
    %v1785 = vlaneseq
    %v1786 = vshrl.u32 %v1785, 7
    %v1787 = vsub.s32 2, %v1786
    %v1788 = vrot.slane %v1773, %v1787
    %v1789 = vlaneseq
    %v1790 = vshrl.u32 %v1789, 7
    %v1791 = vsub.s32 3, %v1790
    %v1792 = vrot.slane %v1773, %v1791
    %v1793 = vlaneseq
    %v1794 = vshrl.u32 %v1793, 7
    %v1795 = vsub.s32 4, %v1794
    %v1796 = vrot.slane %v1773, %v1795
    %v1797 = vlaneseq
    %v1798 = vshrl.u32 %v1797, 7
    %v1799 = vsub.s32 5, %v1798
    %v1800 = vrot.slane %v1773, %v1799
    %v1801 = vlaneseq
    %v1802 = vshrl.u32 %v1801, 7
    %v1803 = vsub.s32 6, %v1802
    %v1804 = vrot.slane %v1773, %v1803
    %v1805 = vlaneseq
    %v1806 = vshrl.u32 %v1805, 7
    %v1807 = vsub.s32 7, %v1806
    %v1808 = vrot.slane %v1773, %v1807
    %v1809 = vlaneseq
    %v1810 = vshrl.u32 %v1809, 7
    %v1811 = vsub.s32 0, %v1810
    %v1812 = vrot.slane %v1774, %v1811
    %v1813 = vlaneseq
    %v1814 = vshrl.u32 %v1813, 7
    %v1815 = vsub.s32 1, %v1814
    %v1816 = vrot.slane %v1774, %v1815
    %v1817 = vlaneseq
    %v1818 = vshrl.u32 %v1817, 7
    %v1819 = vsub.s32 2, %v1818
    %v1820 = vrot.slane %v1774, %v1819
    %v1821 = vlaneseq
    %v1822 = vshrl.u32 %v1821, 7
    %v1823 = vsub.s32 3, %v1822
    %v1824 = vrot.slane %v1774, %v1823
    %v1825 = vlaneseq
    %v1826 = vshrl.u32 %v1825, 7
    %v1827 = vsub.s32 4, %v1826
    %v1828 = vrot.slane %v1774, %v1827
    %v1829 = vlaneseq
    %v1830 = vshrl.u32 %v1829, 7
    %v1831 = vsub.s32 5, %v1830
    %v1832 = vrot.slane %v1774, %v1831
    %v1833 = vlaneseq
    %v1834 = vshrl.u32 %v1833, 7
    %v1835 = vsub.s32 6, %v1834
    %v1836 = vrot.slane %v1774, %v1835
    %v1837 = vlaneseq
    %v1838 = vshrl.u32 %v1837, 7
    %v1839 = vsub.s32 7, %v1838
    %v1840 = vrot.slane %v1774, %v1839
    %v1857 = vmul.f32 %v1592, %v1780
    %v1858 = vmul.f32 %v1594, %v1784
    %v1859 = vmul.f32 %v1596, %v1788
    %v1860 = vmul.f32 %v1598, %v1792
    %v1861 = vmul.f32 %v1600, %v1796
    %v1862 = vmul.f32 %v1602, %v1800
    %v1863 = vmul.f32 %v1604, %v1804
    %v1864 = vmul.f32 %v1606, %v1808
    %v1865 = vmul.f32 %v1608, %v1812
    %v1866 = vmul.f32 %v1610, %v1816
    %v1867 = vmul.f32 %v1612, %v1820
    %v1868 = vmul.f32 %v1614, %v1824
    %v1869 = vmul.f32 %v1616, %v1828
    %v1870 = vmul.f32 %v1618, %v1832
    %v1871 = vmul.f32 %v1620, %v1836
    %v1872 = vmul.f32 %v1622, %v1840
    %1881 = vset.pattern.permute.xlu0 0
    %1882 = vperm.xlu0 %1881, %v1857
    %v1883 = vpop.permute.xlu0 %1882
    %1884 = vset.pattern.permute.xlu0 0
    %1885 = vperm.xlu0 %1884, %v1858
    %v1886 = vpop.permute.xlu0 %1885
    %1887 = vset.pattern.permute.xlu0 0
    %1888 = vperm.xlu0 %1887, %v1859
    %v1889 = vpop.permute.xlu0 %1888
    %1890 = vset.pattern.permute.xlu0 0
    %1891 = vperm.xlu0 %1890, %v1860
    %v1892 = vpop.permute.xlu0 %1891
    %1893 = vset.pattern.permute.xlu0 0
    %1894 = vperm.xlu0 %1893, %v1861
    %v1895 = vpop.permute.xlu0 %1894
    %1896 = vset.pattern.permute.xlu0 0
    %1897 = vperm.xlu0 %1896, %v1862
    %v1898 = vpop.permute.xlu0 %1897
    %1899 = vset.pattern.permute.xlu0 0
    %1900 = vperm.xlu0 %1899, %v1863
    %v1901 = vpop.permute.xlu0 %1900
    %1902 = vset.pattern.permute.xlu0 0
    %1903 = vperm.xlu0 %1902, %v1864
    %v1904 = vpop.permute.xlu0 %1903
    %v1905 = vlaneseq
    %v1906 = vshrl.u32 %v1905, 7
    %v1907 = vsub.s32 %v1398, %v1906
    %v1908 = vrot.slane %v1883, %v1907
    %v1909 = vlaneseq
    %v1910 = vshrl.u32 %v1909, 7
    %v1911 = vsub.s32 %v1398, %v1910
    %v1912 = vrot.slane %v1886, %v1911
    %v1913 = vlaneseq
    %v1914 = vshrl.u32 %v1913, 7
    %v1915 = vsub.s32 %v1398, %v1914
    %v1916 = vrot.slane %v1889, %v1915
    %v1917 = vlaneseq
    %v1918 = vshrl.u32 %v1917, 7
    %v1919 = vsub.s32 %v1398, %v1918
    %v1920 = vrot.slane %v1892, %v1919
    %v1921 = vlaneseq
    %v1922 = vshrl.u32 %v1921, 7
    %v1923 = vsub.s32 %v1398, %v1922
    %v1924 = vrot.slane %v1895, %v1923
    %v1925 = vlaneseq
    %v1926 = vshrl.u32 %v1925, 7
    %v1927 = vsub.s32 %v1398, %v1926
    %v1928 = vrot.slane %v1898, %v1927
    %v1929 = vlaneseq
    %v1930 = vshrl.u32 %v1929, 7
    %v1931 = vsub.s32 %v1398, %v1930
    %v1932 = vrot.slane %v1901, %v1931
    %v1933 = vlaneseq
    %v1934 = vshrl.u32 %v1933, 7
    %v1935 = vsub.s32 %v1398, %v1934
    %v1936 = vrot.slane %v1904, %v1935
    %v1937 = vsel %vm1463, %v1912, %v1908
    %v1938 = vsel %vm1465, %v1916, %v1937
    %v1939 = vsel %vm1467, %v1920, %v1938
    %v1940 = vsel %vm1469, %v1924, %v1939
    %v1941 = vsel %vm1471, %v1928, %v1940
    %v1942 = vsel %vm1473, %v1932, %v1941
    %v1943 = vsel %vm1475, %v1936, %v1942
    %v1944 = vsel %vm1486, %v1943, 0
    %1946 = vmatprep.subr.mxu0 0.0
    %1947 = vmatpush1.msra.mxu0 0.0
    %1948 = vmatprep.subr.mxu0 0.0
    %1949 = vmatpush1.msra.mxu0 0.0
    %1950 = vmatprep.subr.mxu0 0.0
    %1951 = vmatpush1.msra.mxu0 0.0
    %1952 = vmatprep.subr.mxu0 0.0
    %1953 = vmatpush1.msra.mxu0 0.0
    %1954 = vmatprep.subr.mxu0 0.0
    %1955 = vmatpush1.msra.mxu0 0.0
    %1956 = vmatprep.subr.mxu0 0.0
    %1957 = vmatpush1.msra.mxu0 0.0
    %1958 = vmatprep.subr.mxu0 0.0
    %1959 = vmatpush1.msra.mxu0 0.0
    %1960 = vmatprep.subr.mxu0 0.0
    %1961 = vmatpush1.msra.mxu0 0.0
    %1962 = vmatprep.subr.mxu0 0.0
    %1963 = vmatpush1.msra.mxu0 0.0
    %1964 = vmatprep.subr.mxu0 0.0
    %1965 = vmatpush1.msra.mxu0 0.0
    %1966 = vmatprep.subr.mxu0 0.0
    %1967 = vmatpush1.msra.mxu0 0.0
    %1968 = vmatprep.subr.mxu0 0.0
    %1969 = vmatpush1.msra.mxu0 0.0
    %1970 = vmatprep.subr.mxu0 0.0
    %1971 = vmatpush1.msra.mxu0 0.0
    %1972 = vmatprep.subr.mxu0 0.0
    %1973 = vmatpush1.msra.mxu0 0.0
    %1974 = vmatprep.subr.mxu0 0.0
    %1975 = vmatpush1.msra.mxu0 0.0
    %1976 = vmatprep.subr.mxu0 0.0
    %1977 = vmatpush1.msra.mxu0 %v83
    %1978 = vmatprep.subr.mxu0 0.0
    %1979 = vmatpush2.msra.mxu0 0.0
    %1980 = vmatprep.subr.mxu0 0.0
    %1981 = vmatpush2.msra.mxu0 0.0
    %1982 = vmatprep.subr.mxu0 0.0
    %1983 = vmatpush2.msra.mxu0 0.0
    %1984 = vmatprep.subr.mxu0 0.0
    %1985 = vmatpush2.msra.mxu0 0.0
    %1986 = vmatprep.subr.mxu0 0.0
    %1987 = vmatpush2.msra.mxu0 0.0
    %1988 = vmatprep.subr.mxu0 0.0
    %1989 = vmatpush2.msra.mxu0 0.0
    %1990 = vmatprep.subr.mxu0 0.0
    %1991 = vmatpush2.msra.mxu0 0.0
    %1992 = vmatprep.subr.mxu0 0.0
    %1993 = vmatpush2.msra.mxu0 0.0
    %1994 = vmatprep.subr.mxu0 0.0
    %1995 = vmatpush2.msra.mxu0 0.0
    %1996 = vmatprep.subr.mxu0 0.0
    %1997 = vmatpush2.msra.mxu0 0.0
    %1998 = vmatprep.subr.mxu0 0.0
    %1999 = vmatpush2.msra.mxu0 0.0
    %2000 = vmatprep.subr.mxu0 0.0
    %2001 = vmatpush2.msra.mxu0 0.0
    %2002 = vmatprep.subr.mxu0 0.0
    %2003 = vmatpush2.msra.mxu0 0.0
    %2004 = vmatprep.subr.mxu0 0.0
    %2005 = vmatpush2.msra.mxu0 0.0
    %2006 = vmatprep.subr.mxu0 0.0
    %2007 = vmatpush2.msra.mxu0 0.0
    %2008 = vmatprep.subr.mxu0 0.0
    %2009 = vmatpush2.msra.mxu0 0.0
    %2010 = vmatprep.mubr.f32.mxu0 0.0
    %2011 = vmatmul.mubr.f32.gmra.mxu0 %v1944
    %v2012 = vpop.f32.mrf.mxu0
    %v2013 = vadd.f32 0.0, %v2012
    %v2014 = vpop.f32.mrf.mxu0
    %2015 = vdwg.mxu0
    %2024 = vset.pattern.permute.xlu0 0
    %2025 = vperm.xlu0 %2024, %v1865
    %v2026 = vpop.permute.xlu0 %2025
    %2027 = vset.pattern.permute.xlu0 0
    %2028 = vperm.xlu0 %2027, %v1866
    %v2029 = vpop.permute.xlu0 %2028
    %2030 = vset.pattern.permute.xlu0 0
    %2031 = vperm.xlu0 %2030, %v1867
    %v2032 = vpop.permute.xlu0 %2031
    %2033 = vset.pattern.permute.xlu0 0
    %2034 = vperm.xlu0 %2033, %v1868
    %v2035 = vpop.permute.xlu0 %2034
    %2036 = vset.pattern.permute.xlu0 0
    %2037 = vperm.xlu0 %2036, %v1869
    %v2038 = vpop.permute.xlu0 %2037
    %2039 = vset.pattern.permute.xlu0 0
    %2040 = vperm.xlu0 %2039, %v1870
    %v2041 = vpop.permute.xlu0 %2040
    %2042 = vset.pattern.permute.xlu0 0
    %2043 = vperm.xlu0 %2042, %v1871
    %v2044 = vpop.permute.xlu0 %2043
    %2045 = vset.pattern.permute.xlu0 0
    %2046 = vperm.xlu0 %2045, %v1872
    %v2047 = vpop.permute.xlu0 %2046
    %v2048 = vlaneseq
    %v2049 = vshrl.u32 %v2048, 7
    %v2050 = vsub.s32 %v1398, %v2049
    %v2051 = vrot.slane %v2026, %v2050
    %v2052 = vlaneseq
    %v2053 = vshrl.u32 %v2052, 7
    %v2054 = vsub.s32 %v1398, %v2053
    %v2055 = vrot.slane %v2029, %v2054
    %v2056 = vlaneseq
    %v2057 = vshrl.u32 %v2056, 7
    %v2058 = vsub.s32 %v1398, %v2057
    %v2059 = vrot.slane %v2032, %v2058
    %v2060 = vlaneseq
    %v2061 = vshrl.u32 %v2060, 7
    %v2062 = vsub.s32 %v1398, %v2061
    %v2063 = vrot.slane %v2035, %v2062
    %v2064 = vlaneseq
    %v2065 = vshrl.u32 %v2064, 7
    %v2066 = vsub.s32 %v1398, %v2065
    %v2067 = vrot.slane %v2038, %v2066
    %v2068 = vlaneseq
    %v2069 = vshrl.u32 %v2068, 7
    %v2070 = vsub.s32 %v1398, %v2069
    %v2071 = vrot.slane %v2041, %v2070
    %v2072 = vlaneseq
    %v2073 = vshrl.u32 %v2072, 7
    %v2074 = vsub.s32 %v1398, %v2073
    %v2075 = vrot.slane %v2044, %v2074
    %v2076 = vlaneseq
    %v2077 = vshrl.u32 %v2076, 7
    %v2078 = vsub.s32 %v1398, %v2077
    %v2079 = vrot.slane %v2047, %v2078
    %v2080 = vsel %vm1463, %v2055, %v2051
    %v2081 = vsel %vm1465, %v2059, %v2080
    %v2082 = vsel %vm1467, %v2063, %v2081
    %v2083 = vsel %vm1469, %v2067, %v2082
    %v2084 = vsel %vm1471, %v2071, %v2083
    %v2085 = vsel %vm1473, %v2075, %v2084
    %v2086 = vsel %vm1475, %v2079, %v2085
    %v2087 = vsel %vm1486, %v2086, 0
    %2089 = vmatprep.subr.mxu0 0.0
    %2090 = vmatpush1.msra.mxu0 0.0
    %2091 = vmatprep.subr.mxu0 0.0
    %2092 = vmatpush1.msra.mxu0 0.0
    %2093 = vmatprep.subr.mxu0 0.0
    %2094 = vmatpush1.msra.mxu0 0.0
    %2095 = vmatprep.subr.mxu0 0.0
    %2096 = vmatpush1.msra.mxu0 0.0
    %2097 = vmatprep.subr.mxu0 0.0
    %2098 = vmatpush1.msra.mxu0 0.0
    %2099 = vmatprep.subr.mxu0 0.0
    %2100 = vmatpush1.msra.mxu0 0.0
    %2101 = vmatprep.subr.mxu0 0.0
    %2102 = vmatpush1.msra.mxu0 0.0
    %2103 = vmatprep.subr.mxu0 0.0
    %2104 = vmatpush1.msra.mxu0 0.0
    %2105 = vmatprep.subr.mxu0 0.0
    %2106 = vmatpush1.msra.mxu0 0.0
    %2107 = vmatprep.subr.mxu0 0.0
    %2108 = vmatpush1.msra.mxu0 0.0
    %2109 = vmatprep.subr.mxu0 0.0
    %2110 = vmatpush1.msra.mxu0 0.0
    %2111 = vmatprep.subr.mxu0 0.0
    %2112 = vmatpush1.msra.mxu0 0.0
    %2113 = vmatprep.subr.mxu0 0.0
    %2114 = vmatpush1.msra.mxu0 0.0
    %2115 = vmatprep.subr.mxu0 0.0
    %2116 = vmatpush1.msra.mxu0 0.0
    %2117 = vmatprep.subr.mxu0 0.0
    %2118 = vmatpush1.msra.mxu0 0.0
    %2119 = vmatprep.subr.mxu0 0.0
    %2120 = vmatpush1.msra.mxu0 %v84
    %2121 = vmatprep.subr.mxu0 0.0
    %2122 = vmatpush2.msra.mxu0 0.0
    %2123 = vmatprep.subr.mxu0 0.0
    %2124 = vmatpush2.msra.mxu0 0.0
    %2125 = vmatprep.subr.mxu0 0.0
    %2126 = vmatpush2.msra.mxu0 0.0
    %2127 = vmatprep.subr.mxu0 0.0
    %2128 = vmatpush2.msra.mxu0 0.0
    %2129 = vmatprep.subr.mxu0 0.0
    %2130 = vmatpush2.msra.mxu0 0.0
    %2131 = vmatprep.subr.mxu0 0.0
    %2132 = vmatpush2.msra.mxu0 0.0
    %2133 = vmatprep.subr.mxu0 0.0
    %2134 = vmatpush2.msra.mxu0 0.0
    %2135 = vmatprep.subr.mxu0 0.0
    %2136 = vmatpush2.msra.mxu0 0.0
    %2137 = vmatprep.subr.mxu0 0.0
    %2138 = vmatpush2.msra.mxu0 0.0
    %2139 = vmatprep.subr.mxu0 0.0
    %2140 = vmatpush2.msra.mxu0 0.0
    %2141 = vmatprep.subr.mxu0 0.0
    %2142 = vmatpush2.msra.mxu0 0.0
    %2143 = vmatprep.subr.mxu0 0.0
    %2144 = vmatpush2.msra.mxu0 0.0
    %2145 = vmatprep.subr.mxu0 0.0
    %2146 = vmatpush2.msra.mxu0 0.0
    %2147 = vmatprep.subr.mxu0 0.0
    %2148 = vmatpush2.msra.mxu0 0.0
    %2149 = vmatprep.subr.mxu0 0.0
    %2150 = vmatpush2.msra.mxu0 0.0
    %2151 = vmatprep.subr.mxu0 0.0
    %2152 = vmatpush2.msra.mxu0 0.0
    %2153 = vmatprep.mubr.f32.mxu0 0.0
    %2154 = vmatmul.mubr.f32.gmra.mxu0 %v2087
    %v2155 = vpop.f32.mrf.mxu0
    %v2156 = vadd.f32 0.0, %v2155
    %v2157 = vpop.f32.mrf.mxu0
    %2158 = vdwg.mxu0
    %v2159 = vmul.f32 %v81, %v2013
    %v2160 = vmul.f32 %v82, %v2156
    %v2161 = vsel %vm387, %v2159, 0.0
    %2162 = vadd.xlane.f32.xlu0 %v2161
    %v2163 = vpop.xlane.xlu0 %2162
    %v2164 = vsel %vm387, %v2160, 0.0
    %2165 = vadd.xlane.f32.xlu0 %v2164
    %v2166 = vpop.xlane.xlu0 %2165
    %v2169 = vlaneseq
    %v2170 = vshrl.u32 %v2169, 7
    %v2171 = vsub.s32 %v1398, %v2170
    %v2172 = vrot.slane %v2163, %v2171
    %v2173 = vlaneseq
    %v2174 = vshrl.u32 %v2173, 7
    %v2175 = vsub.s32 %v1398, %v2174
    %v2176 = vrot.slane %v2166, %v2175
    %v2177 = vsel %vm1463, %v2176, %v2172
    %vm2179 = vcmask 58368
    %2180 = vst.msk [vmem:[#allocation10] sm:$0x3] %vm2179, %v2177
    // Predicated region
    $region42: #{din_forward.1} parent=1 // pred_check
      _
    $region43: #{din_forward.1} parent=1 // pred_check_branch
      %2182 = sbr.rel (0) target = $region45
    $region44: #{din_forward.1} parent=1 // pred_region
      %s2184 = ssub.s32 32, 32
      %2185 = vsyncadd [#allocation4], %s2184
      %s2187 = sshll.u32 [#allocation10], 4
      %s2188 = int_to_ptr.vmem [resolvable:$true] %s2187
      %2190 = dma.vmem_to_hbm [thread:$0]  %s2188, 32, %s6, [#allocation4]
    $region45: #{din_forward.1} parent=1 // pred_fallthru
      _
    // Predicated region
    $region46: #{din_forward.1} parent=1 // pred_check
      _
    $region47: #{din_forward.1} parent=1 // pred_check_branch
      %2192 = sbr.rel (0) target = $region49
    $region48: #{din_forward.1} parent=1 // pred_region
      %2193 = dma.done [#allocation4], 32
    $region49: #{din_forward.1} parent=1 // pred_fallthru
      _
    %2194 = vsyncpa [#allocation3], 1
    %2195 = vsyncpa [#allocation6], 1
    %2196 = vsyncpa [#allocation9], 1
    %2197 = vsyncpa [#allocation4], 1

</llo_original>
